<compile_context>
chip_gen: v6e
topology: v6e:2x2x1
jax: 0.10.0
libtpu: 0.0.40
codegen_flags: <defaults>
</compile_context>

<pallas_src>
import functools

import jax
import jax.numpy as jnp
from jax.experimental import pallas as pl
from jax.experimental.pallas import tpu as pltpu


def _round_up(x, m):
    return ((x + m - 1) // m) * m


# ----------------------------------------------------------------------------- kernel


def make_mlp_kernel(n_hidden):
    """Fused kernel: n_hidden x (Linear[BN-folded] + ReLU) + final Linear + Softmax(dim=1).

    refs layout:
      refs[0]                     : x tile            (Bt, idim)  f32  (cast to bf16 in-kernel)
      per hidden layer i (2 refs) : w_i (in, out) bf16, b_i (1, out) f32
      then                        : w_out, b_out
      last                        : out tile          (Bt, odim)
    """

    def kernel(*refs):
        x_ref = refs[0]
        idx = 1
        # Cast activations to bf16 in-kernel (no wrapper-side cast copy in HBM).
        h = x_ref[...].astype(jnp.bfloat16)
        for _ in range(n_hidden):
            w_ref, b_ref = refs[idx], refs[idx + 1]
            idx += 2
            # Linear (BN already folded into w/b); MXU bf16 matmul, f32 accumulate.
            z = jnp.dot(h, w_ref[...], preferred_element_type=jnp.float32) + b_ref[...]
            # ReLU, back to bf16 for the next MXU pass.
            h = jnp.maximum(z, 0.0).astype(jnp.bfloat16)

        w_out_ref, b_out_ref, out_ref = refs[idx], refs[idx + 1], refs[idx + 2]
        logits = jnp.dot(h, w_out_ref[...], preferred_element_type=jnp.float32) + b_out_ref[...]

        # Numerically-stable softmax over dim=1 (features), all in f32.
        m = jnp.max(logits, axis=1, keepdims=True)
        e = jnp.exp(logits - m)
        denom = jnp.sum(e, axis=1, keepdims=True)
        inv = pl.reciprocal(denom, approx=True)  # EUP slot; rows sum to 1 to ~1e-3
        out_ref[...] = (e * inv).astype(out_ref.dtype)

    return kernel


# ----------------------------------------------------------------------------- pallas_call wrapper


@functools.partial(
    jax.jit,
    static_argnames=("n_hidden", "batch_tile", "out_dtype", "single_buffer_weights"),
)
def _run(x, *flat_params, n_hidden, batch_tile, out_dtype, single_buffer_weights):
    B, idim = x.shape
    odim = flat_params[-1].shape[1]
    grid = (pl.cdiv(B, batch_tile),)  # partial last block is masked by Pallas

    def _tile_spec(feat):
        # Batch-tiled input/output: block over rows, full feature width (== full array dim).
        return pl.BlockSpec((batch_tile, feat), lambda i: (i, 0))

    use_single_buf = single_buffer_weights and hasattr(pl, "Buffered")

    def _const_spec(shape):
        # Full-array block, constant index_map -> stays VMEM-resident across grid steps.
        if use_single_buf:
            # Block index never changes: one buffer is enough (halves weight VMEM residency).
            return pl.BlockSpec(shape, lambda i: (0,) * len(shape), pipeline_mode=pl.Buffered(1))
        return pl.BlockSpec(shape, lambda i: (0,) * len(shape))

    in_specs = [_tile_spec(idim)] + [_const_spec(a.shape) for a in flat_params]
    out_spec = _tile_spec(odim)

    # Explicit VMEM budget: double-buffered x/out tiles + (single|double)-buffered params
    # + headroom for in-kernel f32 intermediates.  Capped at 56 MiB (safe on v7x's 64 MiB).
    wbuf = 1 if use_single_buf else 2
    param_bytes = sum(int(a.size) * a.dtype.itemsize for a in flat_params)
    x_bytes = batch_tile * idim * x.dtype.itemsize
    o_bytes = batch_tile * odim * jnp.dtype(out_dtype).itemsize
    widest = max(int(a.shape[-1]) for a in flat_params)
    act_bytes = 4 * batch_tile * widest * 4
    needed = 2 * x_bytes + 2 * o_bytes + wbuf * param_bytes + act_bytes
    vmem_limit = int(min(max(2 * needed, 16 << 20), 56 << 20))

    return pl.pallas_call(
        make_mlp_kernel(n_hidden),
        out_shape=jax.ShapeDtypeStruct((B, odim), out_dtype),
        grid=grid,
        in_specs=in_specs,
        out_specs=out_spec,
        compiler_params=pltpu.CompilerParams(
            dimension_semantics=("parallel",),  # batch tiles independent -> megacore-shardable
            vmem_limit_bytes=vmem_limit,
        ),
    )(x, *flat_params)


def _pick_batch_tile(B, max_tile):
    """Pick a batch tile: big (amortize per-step overhead, approach HBM roofline) but still giving
    >= 2 grid steps when possible so both v7x TensorCores get work.  Multiple of 16 (or == B)."""
    half = -(-B // 2)  # ceil(B/2) -> at least 2 grid steps when B > tile
    bt = min(max_tile, _round_up(half, 16), B)
    if bt != B:
        bt = max(8, (bt // 8) * 8)  # sublane-aligned tile; last block may be partial
    return int(bt)


def mlp_forward(x, kernel_params, *, batch_tile=512, out_dtype=jnp.float32):
    """x: (B, idim) f32 (no padding / copying needed).  kernel_params: list of (w_bf16, b_f32) with
    eval-mode BN folded in; last entry is the output layer.  Returns (B, odim) probabilities."""
    B, _ = x.shape
    Bt = _pick_batch_tile(B, batch_tile)

    flat = []
    for w, b in kernel_params:
        flat.extend([w, b])
    n_hidden = len(kernel_params) - 1

    try:
        out = _run(x, *flat, n_hidden=n_hidden, batch_tile=Bt,
                   out_dtype=out_dtype, single_buffer_weights=True)
        return jax.block_until_ready(out)
    except Exception:
        # Fallback for toolchains where pipeline_mode=pl.Buffered(1) is not supported.
        out = _run(x, *flat, n_hidden=n_hidden, batch_tile=Bt,
                   out_dtype=out_dtype, single_buffer_weights=False)
        return jax.block_until_ready(out)


# ----------------------------------------------------------------------------- params & preprocessing


def init_params(key, idim, odim, layers, eps=1e-5):
    """PyTorch-like init: Linear W,b ~ U(-1/sqrt(fan_in), 1/sqrt(fan_in)); BN gamma=1, beta=0,
    running_mean=0, running_var=1 (fresh eval-mode stats)."""
    hidden = []
    in_dim = idim
    for width in layers:
        key, kw, kb = jax.random.split(key, 3)
        bound = float(in_dim) ** -0.5
        hidden.append(
            dict(
                w=jax.random.uniform(kw, (in_dim, width), jnp.float32, -bound, bound),
                b=jax.random.uniform(kb, (width,), jnp.float32, -bound, bound),
                gamma=jnp.ones((width,), jnp.float32),
                beta=jnp.zeros((width,), jnp.float32),
                mean=jnp.zeros((width,), jnp.float32),
                var=jnp.ones((width,), jnp.float32),
                eps=eps,
            )
        )
        in_dim = width
    key, kw, kb = jax.random.split(key, 3)
    bound = float(in_dim) ** -0.5
    w_out = jax.random.uniform(kw, (in_dim, odim), jnp.float32, -bound, bound)
    b_out = jax.random.uniform(kb, (odim,), jnp.float32, -bound, bound)
    return dict(hidden=hidden, w_out=w_out, b_out=b_out)


def fold_bn(params):
    """Fold eval-mode BN into each hidden Linear; cast weights to bf16 (biases stay f32, shaped
    (1, out) for in-kernel broadcast).  No feature padding needed: weight blocks equal the full
    arrays, so the (8,128) BlockSpec constraint is satisfied trivially and the compiler handles
    MXU-internal padding (zero extra HBM bytes)."""
    kernel_params = []
    for lyr in params["hidden"]:
        scale = lyr["gamma"] / jnp.sqrt(lyr["var"] + lyr["eps"])
        shift = lyr["beta"] - lyr["mean"] * scale
        w = (lyr["w"] * scale[None, :]).astype(jnp.bfloat16)   # fold BN scale into weight columns
        b = (lyr["b"] * scale + shift).reshape(1, -1)           # fold BN into bias (f32)
        kernel_params.append((w, b))
    kernel_params.append((params["w_out"].astype(jnp.bfloat16),
                          params["b_out"].reshape(1, -1)))
    return kernel_params


def mlp_reference(x, params):
    """Plain-JAX f32 reference (eval-mode BN), for sanity checking."""
    h = x
    for lyr in params["hidden"]:
        scale = lyr["gamma"] / jnp.sqrt(lyr["var"] + lyr["eps"])
        shift = lyr["beta"] - lyr["mean"] * scale
        h = jnp.maximum((h @ lyr["w"] + lyr["b"]) * scale + shift, 0.0)
    logits = h @ params["w_out"] + params["b_out"]
    return jax.nn.softmax(logits, axis=1)


# ----------------------------------------------------------------------------- demo / self-test


if __name__ == "__main__":
    # Small shapes consistent with the module: idim=32, layers=[64, 32], odim=16.
    # Batch 200 exercises a multi-step grid with a partial (masked) last batch block.
    B, idim, odim = 200, 32, 16
    layers = (64, 32)

    key = jax.random.PRNGKey(0)
    key, kx, kp = jax.random.split(key, 3)
    x = jax.random.normal(kx, (B, idim), jnp.float32)

    params = init_params(kp, idim, odim, layers)
    kernel_params = fold_bn(params)

    out = mlp_forward(x, kernel_params)          # f32 output (out_dtype=jnp.bfloat16 also available)
    out = jax.block_until_ready(out)

    ref = mlp_reference(x, params)

    assert out.shape == (B, odim)
    assert bool(jnp.all(jnp.isfinite(out)))
    # Tolerances account for bf16 MXU matmuls + approx reciprocal in the softmax.
    assert bool(jnp.allclose(jnp.sum(out, axis=1), 1.0, atol=2e-2))
    assert bool(jnp.allclose(out, ref, atol=3e-2, rtol=3e-2))

    print("KERNEL_OK")
</pallas_src>

<mosaic_0001>
module attributes {stable_mosaic.version = 11 : i64} {
  func.func @kernel(%arg0: i32, %arg1: memref<112x32xf32, #tpu.memory_space<vmem>>, %arg2: memref<32x64xbf16, #tpu.memory_space<vmem>>, %arg3: memref<1x64xf32, #tpu.memory_space<vmem>>, %arg4: memref<64x32xbf16, #tpu.memory_space<vmem>>, %arg5: memref<1x32xf32, #tpu.memory_space<vmem>>, %arg6: memref<32x16xbf16, #tpu.memory_space<vmem>>, %arg7: memref<1x16xf32, #tpu.memory_space<vmem>>, %arg8: memref<112x16xf32, #tpu.memory_space<vmem>>) attributes {dimension_semantics = [#tpu.dimension_semantics<parallel>], iteration_bounds = array<i64: 2>, scalar_prefetch = 0 : i64, scratch_operands = 0 : i64, tpu.core_type = #tpu.core_type<tc>, window_params = [{transform_indices = @transform_0, window_bounds = array<i64: 112, 32>}, {pipeline_mode = #tpu.pipeline_mode<synchronous>, transform_indices = @transform_1, window_bounds = array<i64: 32, 64>}, {pipeline_mode = #tpu.pipeline_mode<synchronous>, transform_indices = @transform_2, window_bounds = array<i64: 1, 64>}, {pipeline_mode = #tpu.pipeline_mode<synchronous>, transform_indices = @transform_3, window_bounds = array<i64: 64, 32>}, {pipeline_mode = #tpu.pipeline_mode<synchronous>, transform_indices = @transform_4, window_bounds = array<i64: 1, 32>}, {pipeline_mode = #tpu.pipeline_mode<synchronous>, transform_indices = @transform_5, window_bounds = array<i64: 32, 16>}, {pipeline_mode = #tpu.pipeline_mode<synchronous>, transform_indices = @transform_6, window_bounds = array<i64: 1, 16>}, {transform_indices = @transform_7, window_bounds = array<i64: 112, 16>}]} {
    %c0 = arith.constant 0 : index
    %c0_0 = arith.constant 0 : index
    %0 = vector.load %arg1[%c0, %c0_0] : memref<112x32xf32, #tpu.memory_space<vmem>>, vector<112x32xf32>
    %1 = arith.truncf %0 : vector<112x32xf32> to vector<112x32xbf16>
    %c0_1 = arith.constant 0 : index
    %c0_2 = arith.constant 0 : index
    %2 = vector.load %arg2[%c0_1, %c0_2] : memref<32x64xbf16, #tpu.memory_space<vmem>>, vector<32x64xbf16>
    %cst = arith.constant dense<0.000000e+00> : vector<112x64xf32>
    %3 = tpu.matmul %1, %2, %cst {dimension_numbers = #tpu.dot_dimension_numbers<[1], [0], [0], [1], [0, 0, 1, 1], [], []>} : vector<112x32xbf16>, vector<32x64xbf16>, vector<112x64xf32> -> vector<112x64xf32>
    %c0_3 = arith.constant 0 : index
    %c0_4 = arith.constant 0 : index
    %4 = vector.load %arg3[%c0_3, %c0_4] : memref<1x64xf32, #tpu.memory_space<vmem>>, vector<1x64xf32>
    %5 = vector.broadcast %4 : vector<1x64xf32> to vector<112x64xf32>
    %6 = arith.addf %3, %5 : vector<112x64xf32>
    %cst_5 = arith.constant 0.000000e+00 : f32
    %7 = vector.broadcast %cst_5 : f32 to vector<112x64xf32>
    %8 = arith.maximumf %6, %7 : vector<112x64xf32>
    %9 = arith.truncf %8 : vector<112x64xf32> to vector<112x64xbf16>
    %c0_6 = arith.constant 0 : index
    %c0_7 = arith.constant 0 : index
    %10 = vector.load %arg4[%c0_6, %c0_7] : memref<64x32xbf16, #tpu.memory_space<vmem>>, vector<64x32xbf16>
    %cst_8 = arith.constant dense<0.000000e+00> : vector<112x32xf32>
    %11 = tpu.matmul %9, %10, %cst_8 {dimension_numbers = #tpu.dot_dimension_numbers<[1], [0], [0], [1], [0, 0, 1, 1], [], []>} : vector<112x64xbf16>, vector<64x32xbf16>, vector<112x32xf32> -> vector<112x32xf32>
    %c0_9 = arith.constant 0 : index
    %c0_10 = arith.constant 0 : index
    %12 = vector.load %arg5[%c0_9, %c0_10] : memref<1x32xf32, #tpu.memory_space<vmem>>, vector<1x32xf32>
    %13 = vector.broadcast %12 : vector<1x32xf32> to vector<112x32xf32>
    %14 = arith.addf %11, %13 : vector<112x32xf32>
    %cst_11 = arith.constant 0.000000e+00 : f32
    %15 = vector.broadcast %cst_11 : f32 to vector<112x32xf32>
    %16 = arith.maximumf %14, %15 : vector<112x32xf32>
    %17 = arith.truncf %16 : vector<112x32xf32> to vector<112x32xbf16>
    %c0_12 = arith.constant 0 : index
    %c0_13 = arith.constant 0 : index
    %18 = vector.load %arg6[%c0_12, %c0_13] : memref<32x16xbf16, #tpu.memory_space<vmem>>, vector<32x16xbf16>
    %cst_14 = arith.constant dense<0.000000e+00> : vector<112x16xf32>
    %19 = tpu.matmul %17, %18, %cst_14 {dimension_numbers = #tpu.dot_dimension_numbers<[1], [0], [0], [1], [0, 0, 1, 1], [], []>} : vector<112x32xbf16>, vector<32x16xbf16>, vector<112x16xf32> -> vector<112x16xf32>
    %c0_15 = arith.constant 0 : index
    %c0_16 = arith.constant 0 : index
    %20 = vector.load %arg7[%c0_15, %c0_16] : memref<1x16xf32, #tpu.memory_space<vmem>>, vector<1x16xf32>
    %21 = vector.broadcast %20 : vector<1x16xf32> to vector<112x16xf32>
    %22 = arith.addf %19, %21 : vector<112x16xf32>
    %cst_17 = arith.constant dense<0xFF800000> : vector<112xf32>
    %23 = vector.multi_reduction <maximumf>, %22, %cst_17 [1] : vector<112x16xf32> to vector<112xf32>
    %24 = vector.shape_cast %23 : vector<112xf32> to vector<112x1xf32>
    %25 = vector.broadcast %24 : vector<112x1xf32> to vector<112x16xf32>
    %26 = arith.subf %22, %25 : vector<112x16xf32>
    %27 = math.exp %26 : vector<112x16xf32>
    %cst_18 = arith.constant dense<0.000000e+00> : vector<112xf32>
    %28 = vector.multi_reduction <add>, %27, %cst_18 [1] : vector<112x16xf32> to vector<112xf32>
    %29 = vector.shape_cast %28 : vector<112xf32> to vector<112x1xf32>
    %30 = tpu.reciprocal %29 {approx = true} : vector<112x1xf32> -> vector<112x1xf32>
    %31 = vector.broadcast %30 : vector<112x1xf32> to vector<112x16xf32>
    %32 = arith.mulf %27, %31 : vector<112x16xf32>
    %c0_19 = arith.constant 0 : index
    %c0_20 = arith.constant 0 : index
    %33 = vector.load %arg8[%c0_19, %c0_20] : memref<112x16xf32, #tpu.memory_space<vmem>>, vector<112x16xf32>
    tpu.vector_store %arg8[%c0_19, %c0_20], %32 {strides = array<i32>} : memref<112x16xf32, #tpu.memory_space<vmem>>, vector<112x16xf32>,
    return
  }
  func.func @transform_0(%arg0: i32) -> (i32, i32) {
    %c0_i32 = arith.constant 0 : i32
    %c0_i32_0 = arith.constant 0 : i32
    return %arg0, %c0_i32 : i32, i32
  }
  func.func @transform_1(%arg0: i32) -> (i32, i32) {
    %c0_i32 = arith.constant 0 : i32
    %c0_i32_0 = arith.constant 0 : i32
    %c0_i32_1 = arith.constant 0 : i32
    return %c0_i32, %c0_i32_0 : i32, i32
  }
  func.func @transform_2(%arg0: i32) -> (i32, i32) {
    %c0_i32 = arith.constant 0 : i32
    %c0_i32_0 = arith.constant 0 : i32
    %c0_i32_1 = arith.constant 0 : i32
    return %c0_i32, %c0_i32_0 : i32, i32
  }
  func.func @transform_3(%arg0: i32) -> (i32, i32) {
    %c0_i32 = arith.constant 0 : i32
    %c0_i32_0 = arith.constant 0 : i32
    %c0_i32_1 = arith.constant 0 : i32
    return %c0_i32, %c0_i32_0 : i32, i32
  }
  func.func @transform_4(%arg0: i32) -> (i32, i32) {
    %c0_i32 = arith.constant 0 : i32
    %c0_i32_0 = arith.constant 0 : i32
    %c0_i32_1 = arith.constant 0 : i32
    return %c0_i32, %c0_i32_0 : i32, i32
  }
  func.func @transform_5(%arg0: i32) -> (i32, i32) {
    %c0_i32 = arith.constant 0 : i32
    %c0_i32_0 = arith.constant 0 : i32
    %c0_i32_1 = arith.constant 0 : i32
    return %c0_i32, %c0_i32_0 : i32, i32
  }
  func.func @transform_6(%arg0: i32) -> (i32, i32) {
    %c0_i32 = arith.constant 0 : i32
    %c0_i32_0 = arith.constant 0 : i32
    %c0_i32_1 = arith.constant 0 : i32
    return %c0_i32, %c0_i32_0 : i32, i32
  }
  func.func @transform_7(%arg0: i32) -> (i32, i32) {
    %c0_i32 = arith.constant 0 : i32
    %c0_i32_0 = arith.constant 0 : i32
    return %arg0, %c0_i32 : i32, i32
  }
}

module attributes {stable_mosaic.version = 11 : i64} {
  func.func @kernel(%arg0: i32, %arg1: memref<112x32xf32, #tpu.memory_space<vmem>>, %arg2: memref<32x64xbf16, #tpu.memory_space<vmem>>, %arg3: memref<1x64xf32, #tpu.memory_space<vmem>>, %arg4: memref<64x32xbf16, #tpu.memory_space<vmem>>, %arg5: memref<1x32xf32, #tpu.memory_space<vmem>>, %arg6: memref<32x16xbf16, #tpu.memory_space<vmem>>, %arg7: memref<1x16xf32, #tpu.memory_space<vmem>>, %arg8: memref<112x16xf32, #tpu.memory_space<vmem>>) attributes {dimension_semantics = [#tpu.dimension_semantics<parallel>], iteration_bounds = array<i64: 2>, scalar_prefetch = 0 : i64, scratch_operands = 0 : i64, tpu.core_type = #tpu.core_type<tc>, window_params = [{transform_indices = @transform_0, window_bounds = array<i64: 112, 32>}, {pipeline_mode = #tpu.pipeline_mode<synchronous>, transform_indices = @transform_1, window_bounds = array<i64: 32, 64>}, {pipeline_mode = #tpu.pipeline_mode<synchronous>, transform_indices = @transform_2, window_bounds = array<i64: 1, 64>}, {pipeline_mode = #tpu.pipeline_mode<synchronous>, transform_indices = @transform_3, window_bounds = array<i64: 64, 32>}, {pipeline_mode = #tpu.pipeline_mode<synchronous>, transform_indices = @transform_4, window_bounds = array<i64: 1, 32>}, {pipeline_mode = #tpu.pipeline_mode<synchronous>, transform_indices = @transform_5, window_bounds = array<i64: 32, 16>}, {pipeline_mode = #tpu.pipeline_mode<synchronous>, transform_indices = @transform_6, window_bounds = array<i64: 1, 16>}, {transform_indices = @transform_7, window_bounds = array<i64: 112, 16>}]} {
    %c0 = arith.constant 0 : index
    %c0_0 = arith.constant 0 : index
    %0 = vector.load %arg1[%c0, %c0_0] : memref<112x32xf32, #tpu.memory_space<vmem>>, vector<112x32xf32>
    %1 = arith.truncf %0 : vector<112x32xf32> to vector<112x32xbf16>
    %c0_1 = arith.constant 0 : index
    %c0_2 = arith.constant 0 : index
    %2 = vector.load %arg2[%c0_1, %c0_2] : memref<32x64xbf16, #tpu.memory_space<vmem>>, vector<32x64xbf16>
    %cst = arith.constant dense<0.000000e+00> : vector<112x64xf32>
    %3 = tpu.matmul %1, %2, %cst {dimension_numbers = #tpu.dot_dimension_numbers<[1], [0], [0], [1], [0, 0, 1, 1], [], []>} : vector<112x32xbf16>, vector<32x64xbf16>, vector<112x64xf32> -> vector<112x64xf32>
    %c0_3 = arith.constant 0 : index
    %c0_4 = arith.constant 0 : index
    %4 = vector.load %arg3[%c0_3, %c0_4] : memref<1x64xf32, #tpu.memory_space<vmem>>, vector<1x64xf32>
    %5 = vector.broadcast %4 : vector<1x64xf32> to vector<112x64xf32>
    %6 = arith.addf %3, %5 : vector<112x64xf32>
    %cst_5 = arith.constant 0.000000e+00 : f32
    %7 = vector.broadcast %cst_5 : f32 to vector<112x64xf32>
    %8 = arith.maximumf %6, %7 : vector<112x64xf32>
    %9 = arith.truncf %8 : vector<112x64xf32> to vector<112x64xbf16>
    %c0_6 = arith.constant 0 : index
    %c0_7 = arith.constant 0 : index
    %10 = vector.load %arg4[%c0_6, %c0_7] : memref<64x32xbf16, #tpu.memory_space<vmem>>, vector<64x32xbf16>
    %cst_8 = arith.constant dense<0.000000e+00> : vector<112x32xf32>
    %11 = tpu.matmul %9, %10, %cst_8 {dimension_numbers = #tpu.dot_dimension_numbers<[1], [0], [0], [1], [0, 0, 1, 1], [], []>} : vector<112x64xbf16>, vector<64x32xbf16>, vector<112x32xf32> -> vector<112x32xf32>
    %c0_9 = arith.constant 0 : index
    %c0_10 = arith.constant 0 : index
    %12 = vector.load %arg5[%c0_9, %c0_10] : memref<1x32xf32, #tpu.memory_space<vmem>>, vector<1x32xf32>
    %13 = vector.broadcast %12 : vector<1x32xf32> to vector<112x32xf32>
    %14 = arith.addf %11, %13 : vector<112x32xf32>
    %cst_11 = arith.constant 0.000000e+00 : f32
    %15 = vector.broadcast %cst_11 : f32 to vector<112x32xf32>
    %16 = arith.maximumf %14, %15 : vector<112x32xf32>
    %17 = arith.truncf %16 : vector<112x32xf32> to vector<112x32xbf16>
    %c0_12 = arith.constant 0 : index
    %c0_13 = arith.constant 0 : index
    %18 = vector.load %arg6[%c0_12, %c0_13] : memref<32x16xbf16, #tpu.memory_space<vmem>>, vector<32x16xbf16>
    %cst_14 = arith.constant dense<0.000000e+00> : vector<112x16xf32>
    %19 = tpu.matmul %17, %18, %cst_14 {dimension_numbers = #tpu.dot_dimension_numbers<[1], [0], [0], [1], [0, 0, 1, 1], [], []>} : vector<112x32xbf16>, vector<32x16xbf16>, vector<112x16xf32> -> vector<112x16xf32>
    %c0_15 = arith.constant 0 : index
    %c0_16 = arith.constant 0 : index
    %20 = vector.load %arg7[%c0_15, %c0_16] : memref<1x16xf32, #tpu.memory_space<vmem>>, vector<1x16xf32>
    %21 = vector.broadcast %20 : vector<1x16xf32> to vector<112x16xf32>
    %22 = arith.addf %19, %21 : vector<112x16xf32>
    %cst_17 = arith.constant dense<0xFF800000> : vector<112xf32>
    %23 = vector.multi_reduction <maximumf>, %22, %cst_17 [1] : vector<112x16xf32> to vector<112xf32>
    %24 = vector.shape_cast %23 : vector<112xf32> to vector<112x1xf32>
    %25 = vector.broadcast %24 : vector<112x1xf32> to vector<112x16xf32>
    %26 = arith.subf %22, %25 : vector<112x16xf32>
    %27 = math.exp %26 : vector<112x16xf32>
    %cst_18 = arith.constant dense<0.000000e+00> : vector<112xf32>
    %28 = vector.multi_reduction <add>, %27, %cst_18 [1] : vector<112x16xf32> to vector<112xf32>
    %29 = vector.shape_cast %28 : vector<112xf32> to vector<112x1xf32>
    %30 = tpu.reciprocal %29 {approx = true} : vector<112x1xf32> -> vector<112x1xf32>
    %31 = vector.broadcast %30 : vector<112x1xf32> to vector<112x16xf32>
    %32 = arith.mulf %27, %31 : vector<112x16xf32>
    %c0_19 = arith.constant 0 : index
    %c0_20 = arith.constant 0 : index
    %33 = vector.load %arg8[%c0_19, %c0_20] : memref<112x16xf32, #tpu.memory_space<vmem>>, vector<112x16xf32>
    tpu.vector_store %arg8[%c0_19, %c0_20], %32 {strides = array<i32>} : memref<112x16xf32, #tpu.memory_space<vmem>>, vector<112x16xf32>,
    return
  }
  func.func @transform_0(%arg0: i32) -> (i32, i32) {
    %c0_i32 = arith.constant 0 : i32
    %c0_i32_0 = arith.constant 0 : i32
    return %arg0, %c0_i32 : i32, i32
  }
  func.func @transform_1(%arg0: i32) -> (i32, i32) {
    %c0_i32 = arith.constant 0 : i32
    %c0_i32_0 = arith.constant 0 : i32
    %c0_i32_1 = arith.constant 0 : i32
    return %c0_i32, %c0_i32_0 : i32, i32
  }
  func.func @transform_2(%arg0: i32) -> (i32, i32) {
    %c0_i32 = arith.constant 0 : i32
    %c0_i32_0 = arith.constant 0 : i32
    %c0_i32_1 = arith.constant 0 : i32
    return %c0_i32, %c0_i32_0 : i32, i32
  }
  func.func @transform_3(%arg0: i32) -> (i32, i32) {
    %c0_i32 = arith.constant 0 : i32
    %c0_i32_0 = arith.constant 0 : i32
    %c0_i32_1 = arith.constant 0 : i32
    return %c0_i32, %c0_i32_0 : i32, i32
  }
  func.func @transform_4(%arg0: i32) -> (i32, i32) {
    %c0_i32 = arith.constant 0 : i32
    %c0_i32_0 = arith.constant 0 : i32
    %c0_i32_1 = arith.constant 0 : i32
    return %c0_i32, %c0_i32_0 : i32, i32
  }
  func.func @transform_5(%arg0: i32) -> (i32, i32) {
    %c0_i32 = arith.constant 0 : i32
    %c0_i32_0 = arith.constant 0 : i32
    %c0_i32_1 = arith.constant 0 : i32
    return %c0_i32, %c0_i32_0 : i32, i32
  }
  func.func @transform_6(%arg0: i32) -> (i32, i32) {
    %c0_i32 = arith.constant 0 : i32
    %c0_i32_0 = arith.constant 0 : i32
    %c0_i32_1 = arith.constant 0 : i32
    return %c0_i32, %c0_i32_0 : i32, i32
  }
  func.func @transform_7(%arg0: i32) -> (i32, i32) {
    %c0_i32 = arith.constant 0 : i32
    %c0_i32_0 = arith.constant 0 : i32
    return %arg0, %c0_i32 : i32, i32
  }
}

</mosaic_0001>

<llo_original>
// kernel: _run.1
$region0: #{_run.1}
  #allocation0 [shape = 'u32[]', space=smem, size = 0x4, offset = 0x4, fixed_abs, tag = 'smem constant byte address 0x4 - core index']
  #allocation1 [shape = 'u32[144,128]{1,0:T(1,128)}', space=vmem, size = 0x12000, scoped, tag = 'internal scratch']
  %s0 = inlined_call_operand.vmem [shape: f32[200,32], index: 0, kind: input, shape index: {}]
  %s1 = inlined_call_operand.vmem [shape: bf16[32,64], index: 1, kind: input, shape index: {}]
  %s2 = inlined_call_operand.vmem [shape: f32[1,64], index: 2, kind: input, shape index: {}]
  %s3 = inlined_call_operand.vmem [shape: bf16[64,32], index: 3, kind: input, shape index: {}]
  %s4 = inlined_call_operand.vmem [shape: f32[1,32], index: 4, kind: input, shape index: {}]
  %s5 = inlined_call_operand.vmem [shape: bf16[32,16], index: 5, kind: input, shape index: {}]
  %s6 = inlined_call_operand.vmem [shape: f32[1,16], index: 6, kind: input, shape index: {}]
  %s7 = inlined_call_operand.vmem [shape: f32[200,16], index: 7, kind: output, shape index: {}]
  %s8 = sld [smem:[#allocation0]]
  $region109: #{_run.1} parent=0
    _
  %s10 = ssub.s32 1, %s8
  %s11 = scalar_select 0, %s10, %s8
  $region1: #{_run.1} parent=0
    #allocation2 [shape = 'u8[114688]{0}', space=vmem, size = 0x1c000, scoped, tag = 'output window, operand 0']
    loop: start=0, step=1, limit=4
    $region2: #{_run.1} parent=1 // loop_pre_header
      _
    $region3: #{_run.1} parent=1 // loop_header
      %s13 = sphi 0, %s17
      %p14 = scmp.ge.s32.totalorder %s13, 4
      %s23 = sphi 0, %s25
      %s26 = sphi 0, %s23
      %s27 = sphi 0, %s26
      %s43 = sphi 0, %s27
      %s47 = sphi 0, %s47
      %s49 = sphi 0, %s47
      %s50 = sphi 0, %s49
      %s64 = sphi 0, %s50
      %s68 = sphi 0, %s68
      %s70 = sphi 0, %s68
      %s71 = sphi 0, %s70
      %s85 = sphi 0, %s71
      %s89 = sphi 0, %s89
      %s91 = sphi 0, %s89
      %s92 = sphi 0, %s91
      %s106 = sphi 0, %s92
      %s110 = sphi 0, %s110
      %s112 = sphi 0, %s110
      %s113 = sphi 0, %s112
      %s127 = sphi 0, %s113
      %s131 = sphi 0, %s131
      %s133 = sphi 0, %s131
      %s134 = sphi 0, %s133
      %s148 = sphi 0, %s134
      %s152 = sphi 0, %s152
      %s154 = sphi 0, %s152
      %s155 = sphi 0, %s154
      %s169 = sphi 0, %s155
      %s175 = sphi 0, %s177
      %s178 = sphi 0, %s175
      %s179 = sphi 0, %s178
      %s195 = sphi 0, %s179
    $region4: #{_run.1} parent=1 // loop_header_branch
      %16 = sbr.rel (%p14) target = $region8
    $region5: #{_run.1} parent=1 // loop_body
      %s18 = ssub.s32 %s13, 1
      %s19 = ssub.s32 %s13, 2
      %s20 = sadd.s32 %s13, 1
      %s21 = ssub.s32 %s13, %s20
      %p22 = scmp.eq.s32.totalorder %s21, 0
      %s24 = sadd.s32 %s23, 1
      %s25 = scalar_select %p22, %s23, %s24
      %p28 = pneg %p22
      %p29 = scmp.eq.s32.totalorder %s13, 1
      %p30 = por %p28, %p29
      %p31 = scmp.ne.s32.totalorder %s23, %s26
      %p32 = scmp.eq.s32.totalorder %s13, 0
      %p33 = por %p31, %p32
      %p34 = scmp.ne.s32.totalorder %s23, %s26
      %p35 = scmp.eq.s32.totalorder %s18, 1
      %p36 = por %p34, %p35
      %p37 = scmp.ne.s32.totalorder %s26, %s27
      %p38 = scmp.eq.s32.totalorder %s18, 0
      %p39 = por %p37, %p38
      %p40 = scmp.ne.s32.totalorder %s26, %s27
      %p41 = scmp.eq.s32.totalorder %s19, 1
      %p42 = por %p40, %p41
      %p44 = scmp.ne.s32.totalorder %s27, %s43
      %p45 = scmp.eq.s32.totalorder %s19, 0
      %p46 = por %p44, %p45
      %s48 = sadd.s32 %s47, 1
      %p51 = scmp.eq.s32.totalorder %s13, 1
      %p52 = scmp.ne.s32.totalorder %s47, %s49
      %p53 = scmp.eq.s32.totalorder %s13, 0
      %p54 = por %p52, %p53
      %p55 = scmp.ne.s32.totalorder %s47, %s49
      %p56 = scmp.eq.s32.totalorder %s18, 1
      %p57 = por %p55, %p56
      %p58 = scmp.ne.s32.totalorder %s49, %s50
      %p59 = scmp.eq.s32.totalorder %s18, 0
      %p60 = por %p58, %p59
      %p61 = scmp.ne.s32.totalorder %s49, %s50
      %p62 = scmp.eq.s32.totalorder %s19, 1
      %p63 = por %p61, %p62
      %p65 = scmp.ne.s32.totalorder %s50, %s64
      %p66 = scmp.eq.s32.totalorder %s19, 0
      %p67 = por %p65, %p66
      %s69 = sadd.s32 %s68, 1
      %p72 = scmp.eq.s32.totalorder %s13, 1
      %p73 = scmp.ne.s32.totalorder %s68, %s70
      %p74 = scmp.eq.s32.totalorder %s13, 0
      %p75 = por %p73, %p74
      %p76 = scmp.ne.s32.totalorder %s68, %s70
      %p77 = scmp.eq.s32.totalorder %s18, 1
      %p78 = por %p76, %p77
      %p79 = scmp.ne.s32.totalorder %s70, %s71
      %p80 = scmp.eq.s32.totalorder %s18, 0
      %p81 = por %p79, %p80
      %p82 = scmp.ne.s32.totalorder %s70, %s71
      %p83 = scmp.eq.s32.totalorder %s19, 1
      %p84 = por %p82, %p83
      %p86 = scmp.ne.s32.totalorder %s71, %s85
      %p87 = scmp.eq.s32.totalorder %s19, 0
      %p88 = por %p86, %p87
      %s90 = sadd.s32 %s89, 1
      %p93 = scmp.eq.s32.totalorder %s13, 1
      %p94 = scmp.ne.s32.totalorder %s89, %s91
      %p95 = scmp.eq.s32.totalorder %s13, 0
      %p96 = por %p94, %p95
      %p97 = scmp.ne.s32.totalorder %s89, %s91
      %p98 = scmp.eq.s32.totalorder %s18, 1
      %p99 = por %p97, %p98
      %p100 = scmp.ne.s32.totalorder %s91, %s92
      %p101 = scmp.eq.s32.totalorder %s18, 0
      %p102 = por %p100, %p101
      %p103 = scmp.ne.s32.totalorder %s91, %s92
      %p104 = scmp.eq.s32.totalorder %s19, 1
      %p105 = por %p103, %p104
      %p107 = scmp.ne.s32.totalorder %s92, %s106
      %p108 = scmp.eq.s32.totalorder %s19, 0
      %p109 = por %p107, %p108
      %s111 = sadd.s32 %s110, 1
      %p114 = scmp.eq.s32.totalorder %s13, 1
      %p115 = scmp.ne.s32.totalorder %s110, %s112
      %p116 = scmp.eq.s32.totalorder %s13, 0
      %p117 = por %p115, %p116
      %p118 = scmp.ne.s32.totalorder %s110, %s112
      %p119 = scmp.eq.s32.totalorder %s18, 1
      %p120 = por %p118, %p119
      %p121 = scmp.ne.s32.totalorder %s112, %s113
      %p122 = scmp.eq.s32.totalorder %s18, 0
      %p123 = por %p121, %p122
      %p124 = scmp.ne.s32.totalorder %s112, %s113
      %p125 = scmp.eq.s32.totalorder %s19, 1
      %p126 = por %p124, %p125
      %p128 = scmp.ne.s32.totalorder %s113, %s127
      %p129 = scmp.eq.s32.totalorder %s19, 0
      %p130 = por %p128, %p129
      %s132 = sadd.s32 %s131, 1
      %p135 = scmp.eq.s32.totalorder %s13, 1
      %p136 = scmp.ne.s32.totalorder %s131, %s133
      %p137 = scmp.eq.s32.totalorder %s13, 0
      %p138 = por %p136, %p137
      %p139 = scmp.ne.s32.totalorder %s131, %s133
      %p140 = scmp.eq.s32.totalorder %s18, 1
      %p141 = por %p139, %p140
      %p142 = scmp.ne.s32.totalorder %s133, %s134
      %p143 = scmp.eq.s32.totalorder %s18, 0
      %p144 = por %p142, %p143
      %p145 = scmp.ne.s32.totalorder %s133, %s134
      %p146 = scmp.eq.s32.totalorder %s19, 1
      %p147 = por %p145, %p146
      %p149 = scmp.ne.s32.totalorder %s134, %s148
      %p150 = scmp.eq.s32.totalorder %s19, 0
      %p151 = por %p149, %p150
      %s153 = sadd.s32 %s152, 1
      %p156 = scmp.eq.s32.totalorder %s13, 1
      %p157 = scmp.ne.s32.totalorder %s152, %s154
      %p158 = scmp.eq.s32.totalorder %s13, 0
      %p159 = por %p157, %p158
      %p160 = scmp.ne.s32.totalorder %s152, %s154
      %p161 = scmp.eq.s32.totalorder %s18, 1
      %p162 = por %p160, %p161
      %p163 = scmp.ne.s32.totalorder %s154, %s155
      %p164 = scmp.eq.s32.totalorder %s18, 0
      %p165 = por %p163, %p164
      %p166 = scmp.ne.s32.totalorder %s154, %s155
      %p167 = scmp.eq.s32.totalorder %s19, 1
      %p168 = por %p166, %p167
      %p170 = scmp.ne.s32.totalorder %s155, %s169
      %p171 = scmp.eq.s32.totalorder %s19, 0
      %p172 = por %p170, %p171
      %s173 = ssub.s32 %s13, %s20
      %p174 = scmp.eq.s32.totalorder %s173, 0
      %s176 = sadd.s32 %s175, 1
      %s177 = scalar_select %p174, %s175, %s176
      %p180 = pneg %p174
      %p181 = scmp.eq.s32.totalorder %s13, 1
      %p182 = por %p180, %p181
      %p183 = scmp.ne.s32.totalorder %s175, %s178
      %p184 = scmp.eq.s32.totalorder %s13, 0
      %p185 = por %p183, %p184
      %p186 = scmp.ne.s32.totalorder %s175, %s178
      %p187 = scmp.eq.s32.totalorder %s18, 1
      %p188 = por %p186, %p187
      %p189 = scmp.ne.s32.totalorder %s178, %s179
      %p190 = scmp.eq.s32.totalorder %s18, 0
      %p191 = por %p189, %p190
      %p192 = scmp.ne.s32.totalorder %s178, %s179
      %p193 = scmp.eq.s32.totalorder %s19, 1
      %p194 = por %p192, %p193
      %p196 = scmp.ne.s32.totalorder %s179, %s195
      %p197 = scmp.eq.s32.totalorder %s19, 0
      %p198 = por %p196, %p197
      %p199 = scmp.le.s32.totalorder 1, %s13
      %p200 = scmp.lt.s32.totalorder %s13, 3
      %p201 = pnand %p199, %p200
      %p202 = pneg %p201
      // Predicated region
      $region9: #{_run.1} parent=5 // pred_check
        _
      $region10: #{_run.1} parent=5 // pred_check_branch
        %204 = sbr.rel (%p201) target = $region12
      $region11: #{_run.1} parent=5 // pred_region
        %s205 = ssub.s32 %s13, 1
        // Predicated region
        $region13: #{_run.1} parent=11 // pred_check
          %p206 = pneg %p60
        $region14: #{_run.1} parent=11 // pred_check_branch
          %208 = sbr.rel (%p206) target = $region16
        $region15: #{_run.1} parent=11 // pred_region
          _
        $region16: #{_run.1} parent=11 // pred_fallthru
          _
        // Predicated region
        $region17: #{_run.1} parent=11 // pred_check
          %p209 = pneg %p81
        $region18: #{_run.1} parent=11 // pred_check_branch
          %211 = sbr.rel (%p209) target = $region20
        $region19: #{_run.1} parent=11 // pred_region
          _
        $region20: #{_run.1} parent=11 // pred_fallthru
          _
        // Predicated region
        $region21: #{_run.1} parent=11 // pred_check
          %p212 = pneg %p102
        $region22: #{_run.1} parent=11 // pred_check_branch
          %214 = sbr.rel (%p212) target = $region24
        $region23: #{_run.1} parent=11 // pred_region
          _
        $region24: #{_run.1} parent=11 // pred_fallthru
          _
        // Predicated region
        $region25: #{_run.1} parent=11 // pred_check
          %p215 = pneg %p123
        $region26: #{_run.1} parent=11 // pred_check_branch
          %217 = sbr.rel (%p215) target = $region28
        $region27: #{_run.1} parent=11 // pred_region
          _
        $region28: #{_run.1} parent=11 // pred_fallthru
          _
        // Predicated region
        $region29: #{_run.1} parent=11 // pred_check
          %p218 = pneg %p144
        $region30: #{_run.1} parent=11 // pred_check_branch
          %220 = sbr.rel (%p218) target = $region32
        $region31: #{_run.1} parent=11 // pred_region
          _
        $region32: #{_run.1} parent=11 // pred_fallthru
          _
        // Predicated region
        $region33: #{_run.1} parent=11 // pred_check
          %p221 = pneg %p165
        $region34: #{_run.1} parent=11 // pred_check_branch
          %223 = sbr.rel (%p221) target = $region36
        $region35: #{_run.1} parent=11 // pred_region
          _
        $region36: #{_run.1} parent=11 // pred_fallthru
          _
      $region12: #{_run.1} parent=5 // pred_fallthru
        _
      %p224 = scmp.lt.s32.totalorder %s13, 2
      // Predicated region
      $region37: #{_run.1} parent=5 // pred_check
        %p225 = pneg %p224
      $region38: #{_run.1} parent=5 // pred_check_branch
        %227 = sbr.rel (%p225) target = $region40
      $region39: #{_run.1} parent=5 // pred_region
        // Predicated region
        $region41: #{_run.1} parent=39 // pred_check
          %p228 = pneg %p33
        $region42: #{_run.1} parent=39 // pred_check_branch
          %230 = sbr.rel (%p228) target = $region44
        $region43: #{_run.1} parent=39 // pred_region
          %s231 = smul.u32 14, %s13
          %s232 = ssub.s32 25, %s231
          %p233 = scmp.lt.s32.totalorder %s232, 14
          %s234 = scalar_select %p233, %s232, 14
          %s235 = smul.u32 128, %s234
          %p236 = scmp.lt.s32.totalorder %s231, 24
          %s237 = scalar_select %p236, %s231, 24
          %s238 = smul.addr %s237, 8
          %s239 = scalar_lea.vmem %s0, %s238
          %s240 = smul.u32 14, %s13
          %s241 = ssub.s32 25, %s240
          %p242 = scmp.lt.s32.totalorder %s241, 14
          %s243 = scalar_select %p242, %s241, 14
          %s244 = smul.u32 128, %s243
        $region44: #{_run.1} parent=39 // pred_fallthru
          _
      $region40: #{_run.1} parent=5 // pred_fallthru
        _
      %p245 = scmp.le.s32.totalorder 1, %s13
      %p246 = scmp.lt.s32.totalorder %s13, 3
      %p247 = pnand %p245, %p246
      %p248 = pneg %p247
      // Predicated region
      $region45: #{_run.1} parent=5 // pred_check
        _
      $region46: #{_run.1} parent=5 // pred_check_branch
        %250 = sbr.rel (%p247) target = $region48
      $region47: #{_run.1} parent=5 // pred_region
        %s251 = ssub.s32 %s13, 1
        %s252 = smul.u32 14, %s18
        %s253 = ssub.s32 25, %s252
        %p254 = scmp.lt.s32.totalorder %s253, 14
        %s255 = scalar_select %p254, %s253, 14
        %s256 = smul.u32 128, %s255
        %p257 = scmp.lt.s32.totalorder %s252, 24
        %s258 = scalar_select %p257, %s252, 24
        %s259 = smul.addr %s258, 8
        %s260 = scalar_lea.vmem %s0, %s259
        %p261 = pneg %p39
        %p262 = pneg %p36
        %p263 = pneg %p60
        %p264 = pneg %p57
        %p265 = pneg %p81
        %p266 = pneg %p78
        %p267 = pneg %p102
        %p268 = pneg %p99
        %p269 = pneg %p123
        %p270 = pneg %p120
        %p271 = pneg %p144
        %p272 = pneg %p141
        %p273 = pneg %p165
        %p274 = pneg %p162
        %p275 = pneg %p191
        %p276 = pneg %p188
        %s277 = sand.u32 %s178, 1
        %s278 = sand.u32 %s178, 1
        %s279 = smul.addr %s278, 112
        %s280 = scalar_lea.vmem [#allocation2], %s279
        %s281 = smul.u32 14, %s18
        %s282 = ssub.s32 25, %s281
        %p283 = scmp.lt.s32.totalorder %s282, 14
        %s284 = scalar_select %p283, %s282, 14
        %s285 = smul.u32 128, %s284
        %p286 = scmp.lt.s32.totalorder %s281, 24
        %s287 = scalar_select %p286, %s281, 24
        %s288 = smul.addr %s287, 8
        %s289 = scalar_lea.vmem %s0, %s288
        %s290 = smul.u32 14, %s18
        %s291 = ssub.s32 25, %s290
        %p292 = scmp.lt.s32.totalorder %s291, 14
        %s293 = scalar_select %p292, %s291, 14
        %s294 = smul.u32 128, %s293
        %s295 = smul.u32 14, %s18
        %s296 = ssub.s32 25, %s295
        %p297 = scmp.lt.s32.totalorder %s296, 14
        %s298 = scalar_select %p297, %s296, 14
        %s299 = smul.u32 128, %s298
        %v301 = vld [vmem:[%s289] sm:$0xff]
        %v302 = vld [vmem:[%s289 + $0x8] sm:$0xff]
        %v303 = vld [vmem:[%s289 + $0x10] sm:$0xff]
        %v304 = vld [vmem:[%s289 + $0x18] sm:$0xff]
        %v305 = vld [vmem:[%s289 + $0x20] sm:$0xff]
        %v306 = vld [vmem:[%s289 + $0x28] sm:$0xff]
        %v307 = vld [vmem:[%s289 + $0x30] sm:$0xff]
        %v308 = vld [vmem:[%s289 + $0x38] sm:$0xff]
        %v309 = vld [vmem:[%s289 + $0x40] sm:$0xff]
        %v310 = vld [vmem:[%s289 + $0x48] sm:$0xff]
        %v311 = vld [vmem:[%s289 + $0x50] sm:$0xff]
        %v312 = vld [vmem:[%s289 + $0x58] sm:$0xff]
        %v313 = vld [vmem:[%s289 + $0x60] sm:$0xff]
        %v314 = vld [vmem:[%s289 + $0x68] sm:$0xff]
        %v315 = vpack.c.bf16 %v302, %v301
        %v316 = vpack.c.bf16 %v304, %v303
        %v317 = vpack.c.bf16 %v306, %v305
        %v318 = vpack.c.bf16 %v308, %v307
        %v319 = vpack.c.bf16 %v310, %v309
        %v320 = vpack.c.bf16 %v312, %v311
        %v321 = vpack.c.bf16 %v314, %v313
        %v322 = vld [vmem:[%s1] sm:$0xf]
        %v323 = vld [vmem:[%s1 + $0x4] sm:$0xf]
        %v324 = vld [vmem:[%s1 + $0x8] sm:$0xf]
        %v325 = vld [vmem:[%s1 + $0xc] sm:$0xf]
        %v326 = vld [vmem:[%s2] sm:$0x1]
        %v328 = vlaneseq
        %v329 = vshrl.u32 %v328, 7
        %v330 = vsub.s32 0, %v329
        %v331 = vrot.slane %v326, %v330
        %v337 = vunpack.c.l.b16 %v322
        %v338 = vunpack.c.l.b16 %v323
        %v339 = vunpack.c.l.b16 %v324
        %v340 = vunpack.c.l.b16 %v325
        %v341 = vpack.c.b16 %v338, %v337
        %v342 = vpack.c.b16 %v340, %v339
        %vm345 = vcmask 261120
        %v347 = vsel %vm345, %v315, 0
        %v350 = vsel %vm345, %v316, 0
        %v353 = vsel %vm345, %v317, 0
        %v356 = vsel %vm345, %v318, 0
        %v359 = vsel %vm345, %v319, 0
        %v362 = vsel %vm345, %v320, 0
        %v365 = vsel %vm345, %v321, 0
        %367 = vmatprep.subr.bf16.mxu0 0
        %368 = vmatpush1.bf16.msra.mxu0 0
        %369 = vmatprep.subr.bf16.mxu0 0
        %370 = vmatpush1.bf16.msra.mxu0 0
        %371 = vmatprep.subr.bf16.mxu0 0
        %372 = vmatpush1.bf16.msra.mxu0 0
        %373 = vmatprep.subr.bf16.mxu0 0
        %374 = vmatpush1.bf16.msra.mxu0 0
        %375 = vmatprep.subr.bf16.mxu0 0
        %376 = vmatpush1.bf16.msra.mxu0 0
        %377 = vmatprep.subr.bf16.mxu0 0
        %378 = vmatpush1.bf16.msra.mxu0 0
        %379 = vmatprep.subr.bf16.mxu0 0
        %380 = vmatpush1.bf16.msra.mxu0 %v342
        %381 = vmatprep.subr.bf16.mxu0 0
        %382 = vmatpush1.bf16.msra.mxu0 %v341
        %383 = vmatprep.subr.bf16.mxu0 0
        %384 = vmatpush2.bf16.msra.mxu0 0
        %385 = vmatprep.subr.bf16.mxu0 0
        %386 = vmatpush2.bf16.msra.mxu0 0
        %387 = vmatprep.subr.bf16.mxu0 0
        %388 = vmatpush2.bf16.msra.mxu0 0
        %389 = vmatprep.subr.bf16.mxu0 0
        %390 = vmatpush2.bf16.msra.mxu0 0
        %391 = vmatprep.subr.bf16.mxu0 0
        %392 = vmatpush2.bf16.msra.mxu0 0
        %393 = vmatprep.subr.bf16.mxu0 0
        %394 = vmatpush2.bf16.msra.mxu0 0
        %395 = vmatprep.subr.bf16.mxu0 0
        %396 = vmatpush2.bf16.msra.mxu0 0
        %397 = vmatprep.subr.bf16.mxu0 0
        %398 = vmatpush2.bf16.msra.mxu0 0
        %399 = vmatprep.mubr.bf16.mxu0 0
        %400 = vmatmul.mubr.bf16.gmra.mxu0 %v347
        %v401 = vpop.f32.mrf.mxu0
        %v402 = vadd.f32 %v331, %v401
        %v403 = vpop.f32.mrf.mxu0
        %v404 = vpop.f32.mrf.mxu0
        %v405 = vadd.f32 %v331, %v404
        %v406 = vpop.f32.mrf.mxu0
        %407 = vmatprep.mubr.bf16.mxu0 0
        %408 = vmatmul.mubr.bf16.gmra.mxu0 %v350
        %v409 = vpop.f32.mrf.mxu0
        %v410 = vadd.f32 %v331, %v409
        %v411 = vpop.f32.mrf.mxu0
        %v412 = vpop.f32.mrf.mxu0
        %v413 = vadd.f32 %v331, %v412
        %v414 = vpop.f32.mrf.mxu0
        %415 = vmatprep.mubr.bf16.mxu0 0
        %416 = vmatmul.mubr.bf16.gmra.mxu0 %v353
        %v417 = vpop.f32.mrf.mxu0
        %v418 = vadd.f32 %v331, %v417
        %v419 = vpop.f32.mrf.mxu0
        %v420 = vpop.f32.mrf.mxu0
        %v421 = vadd.f32 %v331, %v420
        %v422 = vpop.f32.mrf.mxu0
        %423 = vmatprep.mubr.bf16.mxu0 0
        %424 = vmatmul.mubr.bf16.gmra.mxu0 %v356
        %v425 = vpop.f32.mrf.mxu0
        %v426 = vadd.f32 %v331, %v425
        %v427 = vpop.f32.mrf.mxu0
        %v428 = vpop.f32.mrf.mxu0
        %v429 = vadd.f32 %v331, %v428
        %v430 = vpop.f32.mrf.mxu0
        %431 = vmatprep.mubr.bf16.mxu0 0
        %432 = vmatmul.mubr.bf16.gmra.mxu0 %v359
        %v433 = vpop.f32.mrf.mxu0
        %v434 = vadd.f32 %v331, %v433
        %v435 = vpop.f32.mrf.mxu0
        %v436 = vpop.f32.mrf.mxu0
        %v437 = vadd.f32 %v331, %v436
        %v438 = vpop.f32.mrf.mxu0
        %439 = vmatprep.mubr.bf16.mxu0 0
        %440 = vmatmul.mubr.bf16.gmra.mxu0 %v362
        %v441 = vpop.f32.mrf.mxu0
        %v442 = vadd.f32 %v331, %v441
        %v443 = vpop.f32.mrf.mxu0
        %v444 = vpop.f32.mrf.mxu0
        %v445 = vadd.f32 %v331, %v444
        %v446 = vpop.f32.mrf.mxu0
        %447 = vmatprep.mubr.bf16.mxu0 0
        %448 = vmatmul.mubr.bf16.gmra.mxu0 %v365
        %v449 = vpop.f32.mrf.mxu0
        %v450 = vadd.f32 %v331, %v449
        %v451 = vpop.f32.mrf.mxu0
        %v452 = vpop.f32.mrf.mxu0
        %v453 = vadd.f32 %v331, %v452
        %v454 = vpop.f32.mrf.mxu0
        %455 = vdwg.mxu0
        %v456 = vmax.f32 %v402, 0.0
        %v457 = vmax.f32 %v405, 0.0
        %v458 = vmax.f32 %v410, 0.0
        %v459 = vmax.f32 %v413, 0.0
        %v460 = vmax.f32 %v418, 0.0
        %v461 = vmax.f32 %v421, 0.0
        %v462 = vmax.f32 %v426, 0.0
        %v463 = vmax.f32 %v429, 0.0
        %v464 = vmax.f32 %v434, 0.0
        %v465 = vmax.f32 %v437, 0.0
        %v466 = vmax.f32 %v442, 0.0
        %v467 = vmax.f32 %v445, 0.0
        %v468 = vmax.f32 %v450, 0.0
        %v469 = vmax.f32 %v453, 0.0
        %v470 = vpack.c.bf16 %v457, %v456
        %v471 = vpack.c.bf16 %v459, %v458
        %v472 = vpack.c.bf16 %v461, %v460
        %v473 = vpack.c.bf16 %v463, %v462
        %v474 = vpack.c.bf16 %v465, %v464
        %v475 = vpack.c.bf16 %v467, %v466
        %v476 = vpack.c.bf16 %v469, %v468
        %v477 = vld [vmem:[%s3] sm:$0xf]
        %v478 = vld [vmem:[%s3 + $0x4] sm:$0xf]
        %v479 = vld [vmem:[%s3 + $0x8] sm:$0xf]
        %v480 = vld [vmem:[%s3 + $0xc] sm:$0xf]
        %v481 = vld [vmem:[%s3 + $0x10] sm:$0xf]
        %v482 = vld [vmem:[%s3 + $0x14] sm:$0xf]
        %v483 = vld [vmem:[%s3 + $0x18] sm:$0xf]
        %v484 = vld [vmem:[%s3 + $0x1c] sm:$0xf]
        %v485 = vld [vmem:[%s4] sm:$0x1]
        %v487 = vlaneseq
        %v488 = vshrl.u32 %v487, 7
        %v489 = vsub.s32 0, %v488
        %v490 = vrot.slane %v485, %v489
        %v500 = vunpack.c.l.b16 %v477
        %v501 = vunpack.c.l.b16 %v478
        %v502 = vunpack.c.l.b16 %v479
        %v503 = vunpack.c.l.b16 %v480
        %v504 = vunpack.c.l.b16 %v481
        %v505 = vunpack.c.l.b16 %v482
        %v506 = vunpack.c.l.b16 %v483
        %v507 = vunpack.c.l.b16 %v484
        %v508 = vpack.c.b16 %v501, %v500
        %v509 = vpack.c.b16 %v503, %v502
        %v510 = vpack.c.b16 %v505, %v504
        %v511 = vpack.c.b16 %v507, %v506
        %vm516 = vcmask 523264
        %v518 = vsel %vm516, %v470, 0
        %v521 = vsel %vm516, %v471, 0
        %v524 = vsel %vm516, %v472, 0
        %v527 = vsel %vm516, %v473, 0
        %v530 = vsel %vm516, %v474, 0
        %v533 = vsel %vm516, %v475, 0
        %v536 = vsel %vm516, %v476, 0
        %538 = vmatprep.subr.bf16.mxu0 0
        %539 = vmatpush1.bf16.msra.mxu0 0
        %540 = vmatprep.subr.bf16.mxu0 0
        %541 = vmatpush1.bf16.msra.mxu0 0
        %542 = vmatprep.subr.bf16.mxu0 0
        %543 = vmatpush1.bf16.msra.mxu0 0
        %544 = vmatprep.subr.bf16.mxu0 0
        %545 = vmatpush1.bf16.msra.mxu0 0
        %546 = vmatprep.subr.bf16.mxu0 0
        %547 = vmatpush1.bf16.msra.mxu0 %v511
        %548 = vmatprep.subr.bf16.mxu0 0
        %549 = vmatpush1.bf16.msra.mxu0 %v510
        %550 = vmatprep.subr.bf16.mxu0 0
        %551 = vmatpush1.bf16.msra.mxu0 %v509
        %552 = vmatprep.subr.bf16.mxu0 0
        %553 = vmatpush1.bf16.msra.mxu0 %v508
        %554 = vmatprep.subr.bf16.mxu0 0
        %555 = vmatpush2.bf16.msra.mxu0 0
        %556 = vmatprep.subr.bf16.mxu0 0
        %557 = vmatpush2.bf16.msra.mxu0 0
        %558 = vmatprep.subr.bf16.mxu0 0
        %559 = vmatpush2.bf16.msra.mxu0 0
        %560 = vmatprep.subr.bf16.mxu0 0
        %561 = vmatpush2.bf16.msra.mxu0 0
        %562 = vmatprep.subr.bf16.mxu0 0
        %563 = vmatpush2.bf16.msra.mxu0 0
        %564 = vmatprep.subr.bf16.mxu0 0
        %565 = vmatpush2.bf16.msra.mxu0 0
        %566 = vmatprep.subr.bf16.mxu0 0
        %567 = vmatpush2.bf16.msra.mxu0 0
        %568 = vmatprep.subr.bf16.mxu0 0
        %569 = vmatpush2.bf16.msra.mxu0 0
        %570 = vmatprep.mubr.bf16.mxu0 0
        %571 = vmatmul.mubr.bf16.gmra.mxu0 %v518
        %v572 = vpop.f32.mrf.mxu0
        %v573 = vadd.f32 %v490, %v572
        %v574 = vpop.f32.mrf.mxu0
        %v575 = vpop.f32.mrf.mxu0
        %v576 = vadd.f32 %v490, %v575
        %v577 = vpop.f32.mrf.mxu0
        %578 = vmatprep.mubr.bf16.mxu0 0
        %579 = vmatmul.mubr.bf16.gmra.mxu0 %v521
        %v580 = vpop.f32.mrf.mxu0
        %v581 = vadd.f32 %v490, %v580
        %v582 = vpop.f32.mrf.mxu0
        %v583 = vpop.f32.mrf.mxu0
        %v584 = vadd.f32 %v490, %v583
        %v585 = vpop.f32.mrf.mxu0
        %586 = vmatprep.mubr.bf16.mxu0 0
        %587 = vmatmul.mubr.bf16.gmra.mxu0 %v524
        %v588 = vpop.f32.mrf.mxu0
        %v589 = vadd.f32 %v490, %v588
        %v590 = vpop.f32.mrf.mxu0
        %v591 = vpop.f32.mrf.mxu0
        %v592 = vadd.f32 %v490, %v591
        %v593 = vpop.f32.mrf.mxu0
        %594 = vmatprep.mubr.bf16.mxu0 0
        %595 = vmatmul.mubr.bf16.gmra.mxu0 %v527
        %v596 = vpop.f32.mrf.mxu0
        %v597 = vadd.f32 %v490, %v596
        %v598 = vpop.f32.mrf.mxu0
        %v599 = vpop.f32.mrf.mxu0
        %v600 = vadd.f32 %v490, %v599
        %v601 = vpop.f32.mrf.mxu0
        %602 = vmatprep.mubr.bf16.mxu0 0
        %603 = vmatmul.mubr.bf16.gmra.mxu0 %v530
        %v604 = vpop.f32.mrf.mxu0
        %v605 = vadd.f32 %v490, %v604
        %v606 = vpop.f32.mrf.mxu0
        %v607 = vpop.f32.mrf.mxu0
        %v608 = vadd.f32 %v490, %v607
        %v609 = vpop.f32.mrf.mxu0
        %610 = vmatprep.mubr.bf16.mxu0 0
        %611 = vmatmul.mubr.bf16.gmra.mxu0 %v533
        %v612 = vpop.f32.mrf.mxu0
        %v613 = vadd.f32 %v490, %v612
        %v614 = vpop.f32.mrf.mxu0
        %v615 = vpop.f32.mrf.mxu0
        %v616 = vadd.f32 %v490, %v615
        %v617 = vpop.f32.mrf.mxu0
        %618 = vmatprep.mubr.bf16.mxu0 0
        %619 = vmatmul.mubr.bf16.gmra.mxu0 %v536
        %v620 = vpop.f32.mrf.mxu0
        %v621 = vadd.f32 %v490, %v620
        %v622 = vpop.f32.mrf.mxu0
        %v623 = vpop.f32.mrf.mxu0
        %v624 = vadd.f32 %v490, %v623
        %v625 = vpop.f32.mrf.mxu0
        %626 = vdwg.mxu0
        %v627 = vmax.f32 %v573, 0.0
        %v628 = vmax.f32 %v576, 0.0
        %v629 = vmax.f32 %v581, 0.0
        %v630 = vmax.f32 %v584, 0.0
        %v631 = vmax.f32 %v589, 0.0
        %v632 = vmax.f32 %v592, 0.0
        %v633 = vmax.f32 %v597, 0.0
        %v634 = vmax.f32 %v600, 0.0
        %v635 = vmax.f32 %v605, 0.0
        %v636 = vmax.f32 %v608, 0.0
        %v637 = vmax.f32 %v613, 0.0
        %v638 = vmax.f32 %v616, 0.0
        %v639 = vmax.f32 %v621, 0.0
        %v640 = vmax.f32 %v624, 0.0
        %v641 = vpack.c.bf16 %v628, %v627
        %v642 = vpack.c.bf16 %v630, %v629
        %v643 = vpack.c.bf16 %v632, %v631
        %v644 = vpack.c.bf16 %v634, %v633
        %v645 = vpack.c.bf16 %v636, %v635
        %v646 = vpack.c.bf16 %v638, %v637
        %v647 = vpack.c.bf16 %v640, %v639
        %v648 = vld [vmem:[%s5] sm:$0xf]
        %v649 = vld [vmem:[%s5 + $0x4] sm:$0xf]
        %v650 = vld [vmem:[%s5 + $0x8] sm:$0xf]
        %v651 = vld [vmem:[%s5 + $0xc] sm:$0xf]
        %v652 = vld [vmem:[%s6] sm:$0x1]
        %v654 = vlaneseq
        %v655 = vshrl.u32 %v654, 7
        %v656 = vsub.s32 0, %v655
        %v657 = vrot.slane %v652, %v656
        %v663 = vunpack.c.l.b16 %v648
        %v664 = vunpack.c.l.b16 %v649
        %v665 = vunpack.c.l.b16 %v650
        %v666 = vunpack.c.l.b16 %v651
        %v667 = vpack.c.b16 %v664, %v663
        %v668 = vpack.c.b16 %v666, %v665
        %v672 = vsel %vm345, %v641, 0
        %v675 = vsel %vm345, %v642, 0
        %v678 = vsel %vm345, %v643, 0
        %v681 = vsel %vm345, %v644, 0
        %v684 = vsel %vm345, %v645, 0
        %v687 = vsel %vm345, %v646, 0
        %v690 = vsel %vm345, %v647, 0
        %692 = vmatprep.subr.bf16.mxu0 0
        %693 = vmatpush1.bf16.msra.mxu0 0
        %694 = vmatprep.subr.bf16.mxu0 0
        %695 = vmatpush1.bf16.msra.mxu0 0
        %696 = vmatprep.subr.bf16.mxu0 0
        %697 = vmatpush1.bf16.msra.mxu0 0
        %698 = vmatprep.subr.bf16.mxu0 0
        %699 = vmatpush1.bf16.msra.mxu0 0
        %700 = vmatprep.subr.bf16.mxu0 0
        %701 = vmatpush1.bf16.msra.mxu0 0
        %702 = vmatprep.subr.bf16.mxu0 0
        %703 = vmatpush1.bf16.msra.mxu0 0
        %704 = vmatprep.subr.bf16.mxu0 0
        %705 = vmatpush1.bf16.msra.mxu0 %v668
        %706 = vmatprep.subr.bf16.mxu0 0
        %707 = vmatpush1.bf16.msra.mxu0 %v667
        %708 = vmatprep.subr.bf16.mxu0 0
        %709 = vmatpush2.bf16.msra.mxu0 0
        %710 = vmatprep.subr.bf16.mxu0 0
        %711 = vmatpush2.bf16.msra.mxu0 0
        %712 = vmatprep.subr.bf16.mxu0 0
        %713 = vmatpush2.bf16.msra.mxu0 0
        %714 = vmatprep.subr.bf16.mxu0 0
        %715 = vmatpush2.bf16.msra.mxu0 0
        %716 = vmatprep.subr.bf16.mxu0 0
        %717 = vmatpush2.bf16.msra.mxu0 0
        %718 = vmatprep.subr.bf16.mxu0 0
        %719 = vmatpush2.bf16.msra.mxu0 0
        %720 = vmatprep.subr.bf16.mxu0 0
        %721 = vmatpush2.bf16.msra.mxu0 0
        %722 = vmatprep.subr.bf16.mxu0 0
        %723 = vmatpush2.bf16.msra.mxu0 0
        %724 = vmatprep.mubr.bf16.mxu0 0
        %725 = vmatmul.mubr.bf16.gmra.mxu0 %v672
        %v726 = vpop.f32.mrf.mxu0
        %v727 = vadd.f32 %v657, %v726
        %v728 = vpop.f32.mrf.mxu0
        %v729 = vpop.f32.mrf.mxu0
        %v730 = vadd.f32 %v657, %v729
        %v731 = vpop.f32.mrf.mxu0
        %732 = vmatprep.mubr.bf16.mxu0 0
        %733 = vmatmul.mubr.bf16.gmra.mxu0 %v675
        %v734 = vpop.f32.mrf.mxu0
        %v735 = vadd.f32 %v657, %v734
        %v736 = vpop.f32.mrf.mxu0
        %v737 = vpop.f32.mrf.mxu0
        %v738 = vadd.f32 %v657, %v737
        %v739 = vpop.f32.mrf.mxu0
        %740 = vmatprep.mubr.bf16.mxu0 0
        %741 = vmatmul.mubr.bf16.gmra.mxu0 %v678
        %v742 = vpop.f32.mrf.mxu0
        %v743 = vadd.f32 %v657, %v742
        %v744 = vpop.f32.mrf.mxu0
        %v745 = vpop.f32.mrf.mxu0
        %v746 = vadd.f32 %v657, %v745
        %v747 = vpop.f32.mrf.mxu0
        %748 = vmatprep.mubr.bf16.mxu0 0
        %749 = vmatmul.mubr.bf16.gmra.mxu0 %v681
        %v750 = vpop.f32.mrf.mxu0
        %v751 = vadd.f32 %v657, %v750
        %v752 = vpop.f32.mrf.mxu0
        %v753 = vpop.f32.mrf.mxu0
        %v754 = vadd.f32 %v657, %v753
        %v755 = vpop.f32.mrf.mxu0
        %756 = vmatprep.mubr.bf16.mxu0 0
        %757 = vmatmul.mubr.bf16.gmra.mxu0 %v684
        %v758 = vpop.f32.mrf.mxu0
        %v759 = vadd.f32 %v657, %v758
        %v760 = vpop.f32.mrf.mxu0
        %v761 = vpop.f32.mrf.mxu0
        %v762 = vadd.f32 %v657, %v761
        %v763 = vpop.f32.mrf.mxu0
        %764 = vmatprep.mubr.bf16.mxu0 0
        %765 = vmatmul.mubr.bf16.gmra.mxu0 %v687
        %v766 = vpop.f32.mrf.mxu0
        %v767 = vadd.f32 %v657, %v766
        %v768 = vpop.f32.mrf.mxu0
        %v769 = vpop.f32.mrf.mxu0
        %v770 = vadd.f32 %v657, %v769
        %v771 = vpop.f32.mrf.mxu0
        %772 = vmatprep.mubr.bf16.mxu0 0
        %773 = vmatmul.mubr.bf16.gmra.mxu0 %v690
        %v774 = vpop.f32.mrf.mxu0
        %v775 = vadd.f32 %v657, %v774
        %v776 = vpop.f32.mrf.mxu0
        %v777 = vpop.f32.mrf.mxu0
        %v778 = vadd.f32 %v657, %v777
        %v779 = vpop.f32.mrf.mxu0
        %780 = vdwg.mxu0
        %vm781 = vcmask 130048
        %v782 = vsel %vm781, %v727, -inf
        %783 = vmax.xlane.f32.xlu0 %v782
        %v784 = vpop.xlane.xlu0 %783
        %v785 = vsel %vm781, %v730, -inf
        %786 = vmax.xlane.f32.xlu0 %v785
        %v787 = vpop.xlane.xlu0 %786
        %v788 = vsel %vm781, %v735, -inf
        %789 = vmax.xlane.f32.xlu0 %v788
        %v790 = vpop.xlane.xlu0 %789
        %v791 = vsel %vm781, %v738, -inf
        %792 = vmax.xlane.f32.xlu0 %v791
        %v793 = vpop.xlane.xlu0 %792
        %v794 = vsel %vm781, %v743, -inf
        %795 = vmax.xlane.f32.xlu0 %v794
        %v796 = vpop.xlane.xlu0 %795
        %v797 = vsel %vm781, %v746, -inf
        %798 = vmax.xlane.f32.xlu0 %v797
        %v799 = vpop.xlane.xlu0 %798
        %v800 = vsel %vm781, %v751, -inf
        %801 = vmax.xlane.f32.xlu0 %v800
        %v802 = vpop.xlane.xlu0 %801
        %v803 = vsel %vm781, %v754, -inf
        %804 = vmax.xlane.f32.xlu0 %v803
        %v805 = vpop.xlane.xlu0 %804
        %v806 = vsel %vm781, %v759, -inf
        %807 = vmax.xlane.f32.xlu0 %v806
        %v808 = vpop.xlane.xlu0 %807
        %v809 = vsel %vm781, %v762, -inf
        %810 = vmax.xlane.f32.xlu0 %v809
        %v811 = vpop.xlane.xlu0 %810
        %v812 = vsel %vm781, %v767, -inf
        %813 = vmax.xlane.f32.xlu0 %v812
        %v814 = vpop.xlane.xlu0 %813
        %v815 = vsel %vm781, %v770, -inf
        %816 = vmax.xlane.f32.xlu0 %v815
        %v817 = vpop.xlane.xlu0 %816
        %v818 = vsel %vm781, %v775, -inf
        %819 = vmax.xlane.f32.xlu0 %v818
        %v820 = vpop.xlane.xlu0 %819
        %v821 = vsel %vm781, %v778, -inf
        %822 = vmax.xlane.f32.xlu0 %v821
        %v823 = vpop.xlane.xlu0 %822
        %v824 = vsub.f32 %v727, %v784
        %v825 = vsub.f32 %v730, %v787
        %v826 = vsub.f32 %v735, %v790
        %v827 = vsub.f32 %v738, %v793
        %v828 = vsub.f32 %v743, %v796
        %v829 = vsub.f32 %v746, %v799
        %v830 = vsub.f32 %v751, %v802
        %v831 = vsub.f32 %v754, %v805
        %v832 = vsub.f32 %v759, %v808
        %v833 = vsub.f32 %v762, %v811
        %v834 = vsub.f32 %v767, %v814
        %v835 = vsub.f32 %v770, %v817
        %v836 = vsub.f32 %v775, %v820
        %v837 = vsub.f32 %v778, %v823
        %v838 = vmul.f32 %v824, 1.442695
        %v839 = vpow.pop %v838
        %v840 = vmul.f32 %v825, 1.442695
        %v841 = vpow.pop %v840
        %v842 = vmul.f32 %v826, 1.442695
        %v843 = vpow.pop %v842
        %v844 = vmul.f32 %v827, 1.442695
        %v845 = vpow.pop %v844
        %v846 = vmul.f32 %v828, 1.442695
        %v847 = vpow.pop %v846
        %v848 = vmul.f32 %v829, 1.442695
        %v849 = vpow.pop %v848
        %v850 = vmul.f32 %v830, 1.442695
        %v851 = vpow.pop %v850
        %v852 = vmul.f32 %v831, 1.442695
        %v853 = vpow.pop %v852
        %v854 = vmul.f32 %v832, 1.442695
        %v855 = vpow.pop %v854
        %v856 = vmul.f32 %v833, 1.442695
        %v857 = vpow.pop %v856
        %v858 = vmul.f32 %v834, 1.442695
        %v859 = vpow.pop %v858
        %v860 = vmul.f32 %v835, 1.442695
        %v861 = vpow.pop %v860
        %v862 = vmul.f32 %v836, 1.442695
        %v863 = vpow.pop %v862
        %v864 = vmul.f32 %v837, 1.442695
        %v865 = vpow.pop %v864
        %v866 = vsel %vm781, %v839, 0.0
        %867 = vadd.xlane.f32.xlu0 %v866
        %v868 = vpop.xlane.xlu0 %867
        %v869 = vsel %vm781, %v841, 0.0
        %870 = vadd.xlane.f32.xlu0 %v869
        %v871 = vpop.xlane.xlu0 %870
        %v872 = vsel %vm781, %v843, 0.0
        %873 = vadd.xlane.f32.xlu0 %v872
        %v874 = vpop.xlane.xlu0 %873
        %v875 = vsel %vm781, %v845, 0.0
        %876 = vadd.xlane.f32.xlu0 %v875
        %v877 = vpop.xlane.xlu0 %876
        %v878 = vsel %vm781, %v847, 0.0
        %879 = vadd.xlane.f32.xlu0 %v878
        %v880 = vpop.xlane.xlu0 %879
        %v881 = vsel %vm781, %v849, 0.0
        %882 = vadd.xlane.f32.xlu0 %v881
        %v883 = vpop.xlane.xlu0 %882
        %v884 = vsel %vm781, %v851, 0.0
        %885 = vadd.xlane.f32.xlu0 %v884
        %v886 = vpop.xlane.xlu0 %885
        %v887 = vsel %vm781, %v853, 0.0
        %888 = vadd.xlane.f32.xlu0 %v887
        %v889 = vpop.xlane.xlu0 %888
        %v890 = vsel %vm781, %v855, 0.0
        %891 = vadd.xlane.f32.xlu0 %v890
        %v892 = vpop.xlane.xlu0 %891
        %v893 = vsel %vm781, %v857, 0.0
        %894 = vadd.xlane.f32.xlu0 %v893
        %v895 = vpop.xlane.xlu0 %894
        %v896 = vsel %vm781, %v859, 0.0
        %897 = vadd.xlane.f32.xlu0 %v896
        %v898 = vpop.xlane.xlu0 %897
        %v899 = vsel %vm781, %v861, 0.0
        %900 = vadd.xlane.f32.xlu0 %v899
        %v901 = vpop.xlane.xlu0 %900
        %v902 = vsel %vm781, %v863, 0.0
        %903 = vadd.xlane.f32.xlu0 %v902
        %v904 = vpop.xlane.xlu0 %903
        %v905 = vsel %vm781, %v865, 0.0
        %906 = vadd.xlane.f32.xlu0 %v905
        %v907 = vpop.xlane.xlu0 %906
        %v908 = vrcp.pop %v868
        %v909 = vrcp.pop %v871
        %v910 = vrcp.pop %v874
        %v911 = vrcp.pop %v877
        %v912 = vrcp.pop %v880
        %v913 = vrcp.pop %v883
        %v914 = vrcp.pop %v886
        %v915 = vrcp.pop %v889
        %v916 = vrcp.pop %v892
        %v917 = vrcp.pop %v895
        %v918 = vrcp.pop %v898
        %v919 = vrcp.pop %v901
        %v920 = vrcp.pop %v904
        %v921 = vrcp.pop %v907
        %v922 = vmul.f32 %v839, %v908
        %v923 = vmul.f32 %v841, %v909
        %v924 = vmul.f32 %v843, %v910
        %v925 = vmul.f32 %v845, %v911
        %v926 = vmul.f32 %v847, %v912
        %v927 = vmul.f32 %v849, %v913
        %v928 = vmul.f32 %v851, %v914
        %v929 = vmul.f32 %v853, %v915
        %v930 = vmul.f32 %v855, %v916
        %v931 = vmul.f32 %v857, %v917
        %v932 = vmul.f32 %v859, %v918
        %v933 = vmul.f32 %v861, %v919
        %v934 = vmul.f32 %v863, %v920
        %v935 = vmul.f32 %v865, %v921
        %936 = vst.msk [vmem:[%s280] sm:$0xff] %vm781, %v922
        %937 = vst.msk [vmem:[%s280 + $0x8] sm:$0xff] %vm781, %v923
        %938 = vst.msk [vmem:[%s280 + $0x10] sm:$0xff] %vm781, %v924
        %939 = vst.msk [vmem:[%s280 + $0x18] sm:$0xff] %vm781, %v925
        %940 = vst.msk [vmem:[%s280 + $0x20] sm:$0xff] %vm781, %v926
        %941 = vst.msk [vmem:[%s280 + $0x28] sm:$0xff] %vm781, %v927
        %942 = vst.msk [vmem:[%s280 + $0x30] sm:$0xff] %vm781, %v928
        %943 = vst.msk [vmem:[%s280 + $0x38] sm:$0xff] %vm781, %v929
        %944 = vst.msk [vmem:[%s280 + $0x40] sm:$0xff] %vm781, %v930
        %945 = vst.msk [vmem:[%s280 + $0x48] sm:$0xff] %vm781, %v931
        %946 = vst.msk [vmem:[%s280 + $0x50] sm:$0xff] %vm781, %v932
        %947 = vst.msk [vmem:[%s280 + $0x58] sm:$0xff] %vm781, %v933
        %948 = vst.msk [vmem:[%s280 + $0x60] sm:$0xff] %vm781, %v934
        %949 = vst.msk [vmem:[%s280 + $0x68] sm:$0xff] %vm781, %v935
        %s950 = sand.u32 %s178, 1
        %s951 = sand.u32 %s178, 1
        %s952 = smul.addr %s951, 112
        %s953 = scalar_lea.vmem [#allocation2], %s952
        // Predicated region
        $region49: #{_run.1} parent=47 // pred_check
          %p954 = pneg %p188
        $region50: #{_run.1} parent=47 // pred_check_branch
          %956 = sbr.rel (%p954) target = $region52
        $region51: #{_run.1} parent=47 // pred_region
          %s957 = smul.u32 14, %s18
          %s958 = ssub.s32 25, %s957
          %p959 = scmp.lt.s32.totalorder %s958, 14
          %s960 = scalar_select %p959, %s958, 14
          %s961 = smul.u32 128, %s960
          %p962 = scmp.ne.s32.totalorder 0, %s961
          %s963 = smul.addr %s957, 8
          %s964 = scalar_lea.vmem %s7, %s963
          // Predicated region
          $region53: #{_run.1} parent=51 // pred_check
            %p965 = pneg %p962
          $region54: #{_run.1} parent=51 // pred_check_branch
            %967 = sbr.rel (%p965) target = $region56
          $region55: #{_run.1} parent=51 // pred_region
            // Predicated region
            $region57: #{_run.1} parent=55 // pred_check
              _
            $region58: #{_run.1} parent=55 // pred_check_branch
              %969 = sbr.rel (0) target = $region60
            $region59: #{_run.1} parent=55 // pred_region
              // Predicated region
              $region79: #{_run.1} parent=59 // pred_check
                _
              $region80: #{_run.1} parent=59 // pred_check_branch
                %1046 = sbr.rel (0) target = $region82
              $region81: #{_run.1} parent=59 // pred_region
                %s1047 = sdiv.u32.pop %s960, 14
                %s1048 = srem.u32.pop %s960, 14
                // While loop
                $region83: #{_run.1} parent=81 // loop_pre_header
                  _
                $region84: #{_run.1} parent=81 // loop_header
                  %s1050 = sphi 0, %s1052
                  %p1051 = scmp.ge.s32.totalorder %s1050, %s1047
                  %s1055 = sphi 0, %s1088
                  %s1056 = sphi %s953, %s1091
                  %s1057 = sphi %s964, %s1092
                $region85: #{_run.1} parent=81 // loop_header_branch
                  %1054 = sbr.rel (%p1051) target = $region89
                $region86: #{_run.1} parent=81 // loop_body
                  %v1058 = vld [vmem:[%s1056] sm:$0xff]
                  %1059 = vst [vmem:[%s1057] sm:$0xff] %v1058
                  %v1060 = vld [vmem:[%s1056 + $0x8] sm:$0xff]
                  %1061 = vst [vmem:[%s1057 + $0x8] sm:$0xff] %v1060
                  %v1062 = vld [vmem:[%s1056 + $0x10] sm:$0xff]
                  %1063 = vst [vmem:[%s1057 + $0x10] sm:$0xff] %v1062
                  %v1064 = vld [vmem:[%s1056 + $0x18] sm:$0xff]
                  %1065 = vst [vmem:[%s1057 + $0x18] sm:$0xff] %v1064
                  %v1066 = vld [vmem:[%s1056 + $0x20] sm:$0xff]
                  %1067 = vst [vmem:[%s1057 + $0x20] sm:$0xff] %v1066
                  %v1068 = vld [vmem:[%s1056 + $0x28] sm:$0xff]
                  %1069 = vst [vmem:[%s1057 + $0x28] sm:$0xff] %v1068
                  %v1070 = vld [vmem:[%s1056 + $0x30] sm:$0xff]
                  %1071 = vst [vmem:[%s1057 + $0x30] sm:$0xff] %v1070
                  %v1072 = vld [vmem:[%s1056 + $0x38] sm:$0xff]
                  %1073 = vst [vmem:[%s1057 + $0x38] sm:$0xff] %v1072
                  %v1074 = vld [vmem:[%s1056 + $0x40] sm:$0xff]
                  %1075 = vst [vmem:[%s1057 + $0x40] sm:$0xff] %v1074
                  %v1076 = vld [vmem:[%s1056 + $0x48] sm:$0xff]
                  %1077 = vst [vmem:[%s1057 + $0x48] sm:$0xff] %v1076
                  %v1078 = vld [vmem:[%s1056 + $0x50] sm:$0xff]
                  %1079 = vst [vmem:[%s1057 + $0x50] sm:$0xff] %v1078
                  %v1080 = vld [vmem:[%s1056 + $0x58] sm:$0xff]
                  %1081 = vst [vmem:[%s1057 + $0x58] sm:$0xff] %v1080
                  %v1082 = vld [vmem:[%s1056 + $0x60] sm:$0xff]
                  %1083 = vst [vmem:[%s1057 + $0x60] sm:$0xff] %v1082
                  %v1084 = vld [vmem:[%s1056 + $0x68] sm:$0xff]
                  %1085 = vst [vmem:[%s1057 + $0x68] sm:$0xff] %v1084
                  %s1086 = sadd.s32 1, %s1055
                  %p1087 = scmp.ge.s32.totalorder %s1086, %s1047
                  %s1088 = scalar_select %p1087, 0, %s1086
                  %s1089 = smul.u32 %s1088, 112
                  %s1090 = smul.u32 %s1088, 112
                  %s1091 = scalar_lea.vmem %s953, %s1089 [#allocation2]
                  %s1092 = scalar_lea.vmem %s964, %s1090
                $region87: #{_run.1} parent=81 // loop_footer
                  %s1052 = sadd.s32 %s1050, 1
                $region88: #{_run.1} parent=81 // loop_footer_branch
                  %1049 = sbr.rel target = $region84
                $region89: #{_run.1} parent=81 // loop_exit
                  _
                %s1093 = sdiv.u32.pop %s960, 14
                %s1094 = srem.u32.pop %s960, 14
                %s1095 = smul.u32 %s1093, 14
                %s1096 = smul.u32 8, %s1095
                %s1097 = scalar_lea.vmem %s953, %s1096 [#allocation2]
                %s1098 = smul.u32 8, %s1095
                %s1099 = scalar_lea.vmem %s964, %s1098
                // While loop
                $region90: #{_run.1} parent=81 // loop_pre_header
                  _
                $region91: #{_run.1} parent=81 // loop_header
                  %s1101 = sphi 0, %s1103
                  %p1102 = scmp.ge.s32.totalorder %s1101, %s1094
                  %s1106 = sphi 0, %s1113
                  %s1107 = sphi %s1097, %s1116
                  %s1108 = sphi %s1099, %s1117
                $region92: #{_run.1} parent=81 // loop_header_branch
                  %1105 = sbr.rel (%p1102) target = $region96
                $region93: #{_run.1} parent=81 // loop_body
                  %v1109 = vld [vmem:[%s1107] sm:$0xff]
                  %1110 = vst [vmem:[%s1108] sm:$0xff] %v1109
                  %s1111 = sadd.s32 1, %s1106
                  %p1112 = scmp.ge.s32.totalorder %s1111, %s1094
                  %s1113 = scalar_select %p1112, 0, %s1111
                  %s1114 = smul.u32 %s1113, 8
                  %s1115 = smul.u32 %s1113, 8
                  %s1116 = scalar_lea.vmem %s1097, %s1114 [#allocation2]
                  %s1117 = scalar_lea.vmem %s1099, %s1115
                $region94: #{_run.1} parent=81 // loop_footer
                  %s1103 = sadd.s32 %s1101, 1
                $region95: #{_run.1} parent=81 // loop_footer_branch
                  %1100 = sbr.rel target = $region91
                $region96: #{_run.1} parent=81 // loop_exit
                  _
              $region82: #{_run.1} parent=59 // pred_fallthru
                _
              // Predicated region
              $region97: #{_run.1} parent=59 // pred_check
                _
              $region98: #{_run.1} parent=59 // pred_check_branch
                %1119 = sbr.rel target = $region100
              $region99: #{_run.1} parent=59 // pred_region
                _
              $region100: #{_run.1} parent=59 // pred_fallthru
                _
            $region60: #{_run.1} parent=55 // pred_fallthru
              _
            // Predicated region
            $region61: #{_run.1} parent=55 // pred_check
              _
            $region62: #{_run.1} parent=55 // pred_check_branch
              %971 = sbr.rel target = $region64
            $region63: #{_run.1} parent=55 // pred_region
              %s973 = ssub.s32 256, 1
              %s974 = sdiv.u32.pop %s960, 14
              %s975 = srem.u32.pop %s960, 14
              // While loop
              $region65: #{_run.1} parent=63 // loop_pre_header
                _
              $region66: #{_run.1} parent=63 // loop_header
                %s977 = sphi 0, %s979
                %p978 = scmp.ge.s32.totalorder %s977, %s974
                %s982 = sphi 0, %s1015
                %s983 = sphi %s953, %s1018
                %s984 = sphi %s964, %s1019
              $region67: #{_run.1} parent=63 // loop_header_branch
                %981 = sbr.rel (%p978) target = $region71
              $region68: #{_run.1} parent=63 // loop_body
                %v985 = vld [vmem:[%s983] sm:%s973]
                %986 = vst [vmem:[%s984] sm:%s973] %v985
                %v987 = vld [vmem:[%s983 + $0x8] sm:%s973]
                %988 = vst [vmem:[%s984 + $0x8] sm:%s973] %v987
                %v989 = vld [vmem:[%s983 + $0x10] sm:%s973]
                %990 = vst [vmem:[%s984 + $0x10] sm:%s973] %v989
                %v991 = vld [vmem:[%s983 + $0x18] sm:%s973]
                %992 = vst [vmem:[%s984 + $0x18] sm:%s973] %v991
                %v993 = vld [vmem:[%s983 + $0x20] sm:%s973]
                %994 = vst [vmem:[%s984 + $0x20] sm:%s973] %v993
                %v995 = vld [vmem:[%s983 + $0x28] sm:%s973]
                %996 = vst [vmem:[%s984 + $0x28] sm:%s973] %v995
                %v997 = vld [vmem:[%s983 + $0x30] sm:%s973]
                %998 = vst [vmem:[%s984 + $0x30] sm:%s973] %v997
                %v999 = vld [vmem:[%s983 + $0x38] sm:%s973]
                %1000 = vst [vmem:[%s984 + $0x38] sm:%s973] %v999
                %v1001 = vld [vmem:[%s983 + $0x40] sm:%s973]
                %1002 = vst [vmem:[%s984 + $0x40] sm:%s973] %v1001
                %v1003 = vld [vmem:[%s983 + $0x48] sm:%s973]
                %1004 = vst [vmem:[%s984 + $0x48] sm:%s973] %v1003
                %v1005 = vld [vmem:[%s983 + $0x50] sm:%s973]
                %1006 = vst [vmem:[%s984 + $0x50] sm:%s973] %v1005
                %v1007 = vld [vmem:[%s983 + $0x58] sm:%s973]
                %1008 = vst [vmem:[%s984 + $0x58] sm:%s973] %v1007
                %v1009 = vld [vmem:[%s983 + $0x60] sm:%s973]
                %1010 = vst [vmem:[%s984 + $0x60] sm:%s973] %v1009
                %v1011 = vld [vmem:[%s983 + $0x68] sm:%s973]
                %1012 = vst [vmem:[%s984 + $0x68] sm:%s973] %v1011
                %s1013 = sadd.s32 1, %s982
                %p1014 = scmp.ge.s32.totalorder %s1013, %s974
                %s1015 = scalar_select %p1014, 0, %s1013
                %s1016 = smul.u32 %s1015, 112
                %s1017 = smul.u32 %s1015, 112
                %s1018 = scalar_lea.vmem %s953, %s1016 [#allocation2]
                %s1019 = scalar_lea.vmem %s964, %s1017
              $region69: #{_run.1} parent=63 // loop_footer
                %s979 = sadd.s32 %s977, 1
              $region70: #{_run.1} parent=63 // loop_footer_branch
                %976 = sbr.rel target = $region66
              $region71: #{_run.1} parent=63 // loop_exit
                _
              %s1020 = sdiv.u32.pop %s960, 14
              %s1021 = srem.u32.pop %s960, 14
              %s1022 = smul.u32 %s1020, 14
              %s1023 = smul.u32 8, %s1022
              %s1024 = scalar_lea.vmem %s953, %s1023 [#allocation2]
              %s1025 = smul.u32 8, %s1022
              %s1026 = scalar_lea.vmem %s964, %s1025
              // While loop
              $region72: #{_run.1} parent=63 // loop_pre_header
                _
              $region73: #{_run.1} parent=63 // loop_header
                %s1028 = sphi 0, %s1030
                %p1029 = scmp.ge.s32.totalorder %s1028, %s1021
                %s1033 = sphi 0, %s1040
                %s1034 = sphi %s1024, %s1043
                %s1035 = sphi %s1026, %s1044
              $region74: #{_run.1} parent=63 // loop_header_branch
                %1032 = sbr.rel (%p1029) target = $region78
              $region75: #{_run.1} parent=63 // loop_body
                %v1036 = vld [vmem:[%s1034] sm:%s973]
                %1037 = vst [vmem:[%s1035] sm:%s973] %v1036
                %s1038 = sadd.s32 1, %s1033
                %p1039 = scmp.ge.s32.totalorder %s1038, %s1021
                %s1040 = scalar_select %p1039, 0, %s1038
                %s1041 = smul.u32 %s1040, 8
                %s1042 = smul.u32 %s1040, 8
                %s1043 = scalar_lea.vmem %s1024, %s1041 [#allocation2]
                %s1044 = scalar_lea.vmem %s1026, %s1042
              $region76: #{_run.1} parent=63 // loop_footer
                %s1030 = sadd.s32 %s1028, 1
              $region77: #{_run.1} parent=63 // loop_footer_branch
                %1027 = sbr.rel target = $region73
              $region78: #{_run.1} parent=63 // loop_exit
                _
            $region64: #{_run.1} parent=55 // pred_fallthru
              _
          $region56: #{_run.1} parent=51 // pred_fallthru
            _
          %1120 = vnop
        $region52: #{_run.1} parent=47 // pred_fallthru
          _
      $region48: #{_run.1} parent=5 // pred_fallthru
        _
      %p1121 = scmp.le.s32.totalorder 2, %s13
      // Predicated region
      $region101: #{_run.1} parent=5 // pred_check
        %p1122 = pneg %p1121
      $region102: #{_run.1} parent=5 // pred_check_branch
        %1124 = sbr.rel (%p1122) target = $region104
      $region103: #{_run.1} parent=5 // pred_region
        %s1125 = ssub.s32 %s13, 2
        // Predicated region
        $region105: #{_run.1} parent=103 // pred_check
          %p1126 = pneg %p194
        $region106: #{_run.1} parent=103 // pred_check_branch
          %1128 = sbr.rel (%p1126) target = $region108
        $region107: #{_run.1} parent=103 // pred_region
          %s1129 = sand.u32 %s179, 1
          %s1130 = sand.u32 %s179, 1
          %s1131 = smul.addr %s1130, 112
          %s1132 = scalar_lea.vmem [#allocation2], %s1131
        $region108: #{_run.1} parent=103 // pred_fallthru
          _
      $region104: #{_run.1} parent=5 // pred_fallthru
        _
    $region6: #{_run.1} parent=1 // loop_footer
      %s17 = sadd.s32 1, %s13
    $region7: #{_run.1} parent=1 // loop_footer_branch
      %12 = sbr.rel target = $region3
    $region8: #{_run.1} parent=1 // loop_exit
      _

// kernel: _run.1
$region0: #{_run.1}
  #allocation0 [shape = 'u32[]', space=smem, size = 0x4, offset = 0x4, fixed_abs, tag = 'smem constant byte address 0x4 - core index']
  #allocation1 [shape = 'u32[144,128]{1,0:T(1,128)}', space=vmem, size = 0x12000, scoped, tag = 'internal scratch']
  %s0 = inlined_call_operand.vmem [shape: f32[200,32], index: 0, kind: input, shape index: {}]
  %s1 = inlined_call_operand.vmem [shape: bf16[32,64], index: 1, kind: input, shape index: {}]
  %s2 = inlined_call_operand.vmem [shape: f32[1,64], index: 2, kind: input, shape index: {}]
  %s3 = inlined_call_operand.vmem [shape: bf16[64,32], index: 3, kind: input, shape index: {}]
  %s4 = inlined_call_operand.vmem [shape: f32[1,32], index: 4, kind: input, shape index: {}]
  %s5 = inlined_call_operand.vmem [shape: bf16[32,16], index: 5, kind: input, shape index: {}]
  %s6 = inlined_call_operand.vmem [shape: f32[1,16], index: 6, kind: input, shape index: {}]
  %s7 = inlined_call_operand.vmem [shape: f32[200,16], index: 7, kind: output, shape index: {}]
  %s8 = sld [smem:[#allocation0]]
  $region109: #{_run.1} parent=0
    _
  %s10 = ssub.s32 1, %s8
  %s11 = scalar_select 0, %s10, %s8
  $region1: #{_run.1} parent=0
    #allocation2 [shape = 'u8[114688]{0}', space=vmem, size = 0x1c000, scoped, tag = 'output window, operand 0']
    loop: start=0, step=1, limit=4
    $region2: #{_run.1} parent=1 // loop_pre_header
      _
    $region3: #{_run.1} parent=1 // loop_header
      %s13 = sphi 0, %s17
      %p14 = scmp.ge.s32.totalorder %s13, 4
      %s23 = sphi 0, %s25
      %s26 = sphi 0, %s23
      %s27 = sphi 0, %s26
      %s43 = sphi 0, %s27
      %s47 = sphi 0, %s47
      %s49 = sphi 0, %s47
      %s50 = sphi 0, %s49
      %s64 = sphi 0, %s50
      %s68 = sphi 0, %s68
      %s70 = sphi 0, %s68
      %s71 = sphi 0, %s70
      %s85 = sphi 0, %s71
      %s89 = sphi 0, %s89
      %s91 = sphi 0, %s89
      %s92 = sphi 0, %s91
      %s106 = sphi 0, %s92
      %s110 = sphi 0, %s110
      %s112 = sphi 0, %s110
      %s113 = sphi 0, %s112
      %s127 = sphi 0, %s113
      %s131 = sphi 0, %s131
      %s133 = sphi 0, %s131
      %s134 = sphi 0, %s133
      %s148 = sphi 0, %s134
      %s152 = sphi 0, %s152
      %s154 = sphi 0, %s152
      %s155 = sphi 0, %s154
      %s169 = sphi 0, %s155
      %s175 = sphi 0, %s177
      %s178 = sphi 0, %s175
      %s179 = sphi 0, %s178
      %s195 = sphi 0, %s179
    $region4: #{_run.1} parent=1 // loop_header_branch
      %16 = sbr.rel (%p14) target = $region8
    $region5: #{_run.1} parent=1 // loop_body
      %s18 = ssub.s32 %s13, 1
      %s19 = ssub.s32 %s13, 2
      %s20 = sadd.s32 %s13, 1
      %s21 = ssub.s32 %s13, %s20
      %p22 = scmp.eq.s32.totalorder %s21, 0
      %s24 = sadd.s32 %s23, 1
      %s25 = scalar_select %p22, %s23, %s24
      %p28 = pneg %p22
      %p29 = scmp.eq.s32.totalorder %s13, 1
      %p30 = por %p28, %p29
      %p31 = scmp.ne.s32.totalorder %s23, %s26
      %p32 = scmp.eq.s32.totalorder %s13, 0
      %p33 = por %p31, %p32
      %p34 = scmp.ne.s32.totalorder %s23, %s26
      %p35 = scmp.eq.s32.totalorder %s18, 1
      %p36 = por %p34, %p35
      %p37 = scmp.ne.s32.totalorder %s26, %s27
      %p38 = scmp.eq.s32.totalorder %s18, 0
      %p39 = por %p37, %p38
      %p40 = scmp.ne.s32.totalorder %s26, %s27
      %p41 = scmp.eq.s32.totalorder %s19, 1
      %p42 = por %p40, %p41
      %p44 = scmp.ne.s32.totalorder %s27, %s43
      %p45 = scmp.eq.s32.totalorder %s19, 0
      %p46 = por %p44, %p45
      %s48 = sadd.s32 %s47, 1
      %p51 = scmp.eq.s32.totalorder %s13, 1
      %p52 = scmp.ne.s32.totalorder %s47, %s49
      %p53 = scmp.eq.s32.totalorder %s13, 0
      %p54 = por %p52, %p53
      %p55 = scmp.ne.s32.totalorder %s47, %s49
      %p56 = scmp.eq.s32.totalorder %s18, 1
      %p57 = por %p55, %p56
      %p58 = scmp.ne.s32.totalorder %s49, %s50
      %p59 = scmp.eq.s32.totalorder %s18, 0
      %p60 = por %p58, %p59
      %p61 = scmp.ne.s32.totalorder %s49, %s50
      %p62 = scmp.eq.s32.totalorder %s19, 1
      %p63 = por %p61, %p62
      %p65 = scmp.ne.s32.totalorder %s50, %s64
      %p66 = scmp.eq.s32.totalorder %s19, 0
      %p67 = por %p65, %p66
      %s69 = sadd.s32 %s68, 1
      %p72 = scmp.eq.s32.totalorder %s13, 1
      %p73 = scmp.ne.s32.totalorder %s68, %s70
      %p74 = scmp.eq.s32.totalorder %s13, 0
      %p75 = por %p73, %p74
      %p76 = scmp.ne.s32.totalorder %s68, %s70
      %p77 = scmp.eq.s32.totalorder %s18, 1
      %p78 = por %p76, %p77
      %p79 = scmp.ne.s32.totalorder %s70, %s71
      %p80 = scmp.eq.s32.totalorder %s18, 0
      %p81 = por %p79, %p80
      %p82 = scmp.ne.s32.totalorder %s70, %s71
      %p83 = scmp.eq.s32.totalorder %s19, 1
      %p84 = por %p82, %p83
      %p86 = scmp.ne.s32.totalorder %s71, %s85
      %p87 = scmp.eq.s32.totalorder %s19, 0
      %p88 = por %p86, %p87
      %s90 = sadd.s32 %s89, 1
      %p93 = scmp.eq.s32.totalorder %s13, 1
      %p94 = scmp.ne.s32.totalorder %s89, %s91
      %p95 = scmp.eq.s32.totalorder %s13, 0
      %p96 = por %p94, %p95
      %p97 = scmp.ne.s32.totalorder %s89, %s91
      %p98 = scmp.eq.s32.totalorder %s18, 1
      %p99 = por %p97, %p98
      %p100 = scmp.ne.s32.totalorder %s91, %s92
      %p101 = scmp.eq.s32.totalorder %s18, 0
      %p102 = por %p100, %p101
      %p103 = scmp.ne.s32.totalorder %s91, %s92
      %p104 = scmp.eq.s32.totalorder %s19, 1
      %p105 = por %p103, %p104
      %p107 = scmp.ne.s32.totalorder %s92, %s106
      %p108 = scmp.eq.s32.totalorder %s19, 0
      %p109 = por %p107, %p108
      %s111 = sadd.s32 %s110, 1
      %p114 = scmp.eq.s32.totalorder %s13, 1
      %p115 = scmp.ne.s32.totalorder %s110, %s112
      %p116 = scmp.eq.s32.totalorder %s13, 0
      %p117 = por %p115, %p116
      %p118 = scmp.ne.s32.totalorder %s110, %s112
      %p119 = scmp.eq.s32.totalorder %s18, 1
      %p120 = por %p118, %p119
      %p121 = scmp.ne.s32.totalorder %s112, %s113
      %p122 = scmp.eq.s32.totalorder %s18, 0
      %p123 = por %p121, %p122
      %p124 = scmp.ne.s32.totalorder %s112, %s113
      %p125 = scmp.eq.s32.totalorder %s19, 1
      %p126 = por %p124, %p125
      %p128 = scmp.ne.s32.totalorder %s113, %s127
      %p129 = scmp.eq.s32.totalorder %s19, 0
      %p130 = por %p128, %p129
      %s132 = sadd.s32 %s131, 1
      %p135 = scmp.eq.s32.totalorder %s13, 1
      %p136 = scmp.ne.s32.totalorder %s131, %s133
      %p137 = scmp.eq.s32.totalorder %s13, 0
      %p138 = por %p136, %p137
      %p139 = scmp.ne.s32.totalorder %s131, %s133
      %p140 = scmp.eq.s32.totalorder %s18, 1
      %p141 = por %p139, %p140
      %p142 = scmp.ne.s32.totalorder %s133, %s134
      %p143 = scmp.eq.s32.totalorder %s18, 0
      %p144 = por %p142, %p143
      %p145 = scmp.ne.s32.totalorder %s133, %s134
      %p146 = scmp.eq.s32.totalorder %s19, 1
      %p147 = por %p145, %p146
      %p149 = scmp.ne.s32.totalorder %s134, %s148
      %p150 = scmp.eq.s32.totalorder %s19, 0
      %p151 = por %p149, %p150
      %s153 = sadd.s32 %s152, 1
      %p156 = scmp.eq.s32.totalorder %s13, 1
      %p157 = scmp.ne.s32.totalorder %s152, %s154
      %p158 = scmp.eq.s32.totalorder %s13, 0
      %p159 = por %p157, %p158
      %p160 = scmp.ne.s32.totalorder %s152, %s154
      %p161 = scmp.eq.s32.totalorder %s18, 1
      %p162 = por %p160, %p161
      %p163 = scmp.ne.s32.totalorder %s154, %s155
      %p164 = scmp.eq.s32.totalorder %s18, 0
      %p165 = por %p163, %p164
      %p166 = scmp.ne.s32.totalorder %s154, %s155
      %p167 = scmp.eq.s32.totalorder %s19, 1
      %p168 = por %p166, %p167
      %p170 = scmp.ne.s32.totalorder %s155, %s169
      %p171 = scmp.eq.s32.totalorder %s19, 0
      %p172 = por %p170, %p171
      %s173 = ssub.s32 %s13, %s20
      %p174 = scmp.eq.s32.totalorder %s173, 0
      %s176 = sadd.s32 %s175, 1
      %s177 = scalar_select %p174, %s175, %s176
      %p180 = pneg %p174
      %p181 = scmp.eq.s32.totalorder %s13, 1
      %p182 = por %p180, %p181
      %p183 = scmp.ne.s32.totalorder %s175, %s178
      %p184 = scmp.eq.s32.totalorder %s13, 0
      %p185 = por %p183, %p184
      %p186 = scmp.ne.s32.totalorder %s175, %s178
      %p187 = scmp.eq.s32.totalorder %s18, 1
      %p188 = por %p186, %p187
      %p189 = scmp.ne.s32.totalorder %s178, %s179
      %p190 = scmp.eq.s32.totalorder %s18, 0
      %p191 = por %p189, %p190
      %p192 = scmp.ne.s32.totalorder %s178, %s179
      %p193 = scmp.eq.s32.totalorder %s19, 1
      %p194 = por %p192, %p193
      %p196 = scmp.ne.s32.totalorder %s179, %s195
      %p197 = scmp.eq.s32.totalorder %s19, 0
      %p198 = por %p196, %p197
      %p199 = scmp.le.s32.totalorder 1, %s13
      %p200 = scmp.lt.s32.totalorder %s13, 3
      %p201 = pnand %p199, %p200
      %p202 = pneg %p201
      // Predicated region
      $region9: #{_run.1} parent=5 // pred_check
        _
      $region10: #{_run.1} parent=5 // pred_check_branch
        %204 = sbr.rel (%p201) target = $region12
      $region11: #{_run.1} parent=5 // pred_region
        %s205 = ssub.s32 %s13, 1
        // Predicated region
        $region13: #{_run.1} parent=11 // pred_check
          %p206 = pneg %p60
        $region14: #{_run.1} parent=11 // pred_check_branch
          %208 = sbr.rel (%p206) target = $region16
        $region15: #{_run.1} parent=11 // pred_region
          _
        $region16: #{_run.1} parent=11 // pred_fallthru
          _
        // Predicated region
        $region17: #{_run.1} parent=11 // pred_check
          %p209 = pneg %p81
        $region18: #{_run.1} parent=11 // pred_check_branch
          %211 = sbr.rel (%p209) target = $region20
        $region19: #{_run.1} parent=11 // pred_region
          _
        $region20: #{_run.1} parent=11 // pred_fallthru
          _
        // Predicated region
        $region21: #{_run.1} parent=11 // pred_check
          %p212 = pneg %p102
        $region22: #{_run.1} parent=11 // pred_check_branch
          %214 = sbr.rel (%p212) target = $region24
        $region23: #{_run.1} parent=11 // pred_region
          _
        $region24: #{_run.1} parent=11 // pred_fallthru
          _
        // Predicated region
        $region25: #{_run.1} parent=11 // pred_check
          %p215 = pneg %p123
        $region26: #{_run.1} parent=11 // pred_check_branch
          %217 = sbr.rel (%p215) target = $region28
        $region27: #{_run.1} parent=11 // pred_region
          _
        $region28: #{_run.1} parent=11 // pred_fallthru
          _
        // Predicated region
        $region29: #{_run.1} parent=11 // pred_check
          %p218 = pneg %p144
        $region30: #{_run.1} parent=11 // pred_check_branch
          %220 = sbr.rel (%p218) target = $region32
        $region31: #{_run.1} parent=11 // pred_region
          _
        $region32: #{_run.1} parent=11 // pred_fallthru
          _
        // Predicated region
        $region33: #{_run.1} parent=11 // pred_check
          %p221 = pneg %p165
        $region34: #{_run.1} parent=11 // pred_check_branch
          %223 = sbr.rel (%p221) target = $region36
        $region35: #{_run.1} parent=11 // pred_region
          _
        $region36: #{_run.1} parent=11 // pred_fallthru
          _
      $region12: #{_run.1} parent=5 // pred_fallthru
        _
      %p224 = scmp.lt.s32.totalorder %s13, 2
      // Predicated region
      $region37: #{_run.1} parent=5 // pred_check
        %p225 = pneg %p224
      $region38: #{_run.1} parent=5 // pred_check_branch
        %227 = sbr.rel (%p225) target = $region40
      $region39: #{_run.1} parent=5 // pred_region
        // Predicated region
        $region41: #{_run.1} parent=39 // pred_check
          %p228 = pneg %p33
        $region42: #{_run.1} parent=39 // pred_check_branch
          %230 = sbr.rel (%p228) target = $region44
        $region43: #{_run.1} parent=39 // pred_region
          %s231 = smul.u32 14, %s13
          %s232 = ssub.s32 25, %s231
          %p233 = scmp.lt.s32.totalorder %s232, 14
          %s234 = scalar_select %p233, %s232, 14
          %s235 = smul.u32 128, %s234
          %p236 = scmp.lt.s32.totalorder %s231, 24
          %s237 = scalar_select %p236, %s231, 24
          %s238 = smul.addr %s237, 8
          %s239 = scalar_lea.vmem %s0, %s238
          %s240 = smul.u32 14, %s13
          %s241 = ssub.s32 25, %s240
          %p242 = scmp.lt.s32.totalorder %s241, 14
          %s243 = scalar_select %p242, %s241, 14
          %s244 = smul.u32 128, %s243
        $region44: #{_run.1} parent=39 // pred_fallthru
          _
      $region40: #{_run.1} parent=5 // pred_fallthru
        _
      %p245 = scmp.le.s32.totalorder 1, %s13
      %p246 = scmp.lt.s32.totalorder %s13, 3
      %p247 = pnand %p245, %p246
      %p248 = pneg %p247
      // Predicated region
      $region45: #{_run.1} parent=5 // pred_check
        _
      $region46: #{_run.1} parent=5 // pred_check_branch
        %250 = sbr.rel (%p247) target = $region48
      $region47: #{_run.1} parent=5 // pred_region
        %s251 = ssub.s32 %s13, 1
        %s252 = smul.u32 14, %s18
        %s253 = ssub.s32 25, %s252
        %p254 = scmp.lt.s32.totalorder %s253, 14
        %s255 = scalar_select %p254, %s253, 14
        %s256 = smul.u32 128, %s255
        %p257 = scmp.lt.s32.totalorder %s252, 24
        %s258 = scalar_select %p257, %s252, 24
        %s259 = smul.addr %s258, 8
        %s260 = scalar_lea.vmem %s0, %s259
        %p261 = pneg %p39
        %p262 = pneg %p36
        %p263 = pneg %p60
        %p264 = pneg %p57
        %p265 = pneg %p81
        %p266 = pneg %p78
        %p267 = pneg %p102
        %p268 = pneg %p99
        %p269 = pneg %p123
        %p270 = pneg %p120
        %p271 = pneg %p144
        %p272 = pneg %p141
        %p273 = pneg %p165
        %p274 = pneg %p162
        %p275 = pneg %p191
        %p276 = pneg %p188
        %s277 = sand.u32 %s178, 1
        %s278 = sand.u32 %s178, 1
        %s279 = smul.addr %s278, 112
        %s280 = scalar_lea.vmem [#allocation2], %s279
        %s281 = smul.u32 14, %s18
        %s282 = ssub.s32 25, %s281
        %p283 = scmp.lt.s32.totalorder %s282, 14
        %s284 = scalar_select %p283, %s282, 14
        %s285 = smul.u32 128, %s284
        %p286 = scmp.lt.s32.totalorder %s281, 24
        %s287 = scalar_select %p286, %s281, 24
        %s288 = smul.addr %s287, 8
        %s289 = scalar_lea.vmem %s0, %s288
        %s290 = smul.u32 14, %s18
        %s291 = ssub.s32 25, %s290
        %p292 = scmp.lt.s32.totalorder %s291, 14
        %s293 = scalar_select %p292, %s291, 14
        %s294 = smul.u32 128, %s293
        %s295 = smul.u32 14, %s18
        %s296 = ssub.s32 25, %s295
        %p297 = scmp.lt.s32.totalorder %s296, 14
        %s298 = scalar_select %p297, %s296, 14
        %s299 = smul.u32 128, %s298
        %v301 = vld [vmem:[%s289] sm:$0xff]
        %v302 = vld [vmem:[%s289 + $0x8] sm:$0xff]
        %v303 = vld [vmem:[%s289 + $0x10] sm:$0xff]
        %v304 = vld [vmem:[%s289 + $0x18] sm:$0xff]
        %v305 = vld [vmem:[%s289 + $0x20] sm:$0xff]
        %v306 = vld [vmem:[%s289 + $0x28] sm:$0xff]
        %v307 = vld [vmem:[%s289 + $0x30] sm:$0xff]
        %v308 = vld [vmem:[%s289 + $0x38] sm:$0xff]
        %v309 = vld [vmem:[%s289 + $0x40] sm:$0xff]
        %v310 = vld [vmem:[%s289 + $0x48] sm:$0xff]
        %v311 = vld [vmem:[%s289 + $0x50] sm:$0xff]
        %v312 = vld [vmem:[%s289 + $0x58] sm:$0xff]
        %v313 = vld [vmem:[%s289 + $0x60] sm:$0xff]
        %v314 = vld [vmem:[%s289 + $0x68] sm:$0xff]
        %v315 = vpack.c.bf16 %v302, %v301
        %v316 = vpack.c.bf16 %v304, %v303
        %v317 = vpack.c.bf16 %v306, %v305
        %v318 = vpack.c.bf16 %v308, %v307
        %v319 = vpack.c.bf16 %v310, %v309
        %v320 = vpack.c.bf16 %v312, %v311
        %v321 = vpack.c.bf16 %v314, %v313
        %v322 = vld [vmem:[%s1] sm:$0xf]
        %v323 = vld [vmem:[%s1 + $0x4] sm:$0xf]
        %v324 = vld [vmem:[%s1 + $0x8] sm:$0xf]
        %v325 = vld [vmem:[%s1 + $0xc] sm:$0xf]
        %v326 = vld [vmem:[%s2] sm:$0x1]
        %v328 = vlaneseq
        %v329 = vshrl.u32 %v328, 7
        %v330 = vsub.s32 0, %v329
        %v331 = vrot.slane %v326, %v330
        %v337 = vunpack.c.l.b16 %v322
        %v338 = vunpack.c.l.b16 %v323
        %v339 = vunpack.c.l.b16 %v324
        %v340 = vunpack.c.l.b16 %v325
        %v341 = vpack.c.b16 %v338, %v337
        %v342 = vpack.c.b16 %v340, %v339
        %vm345 = vcmask 261120
        %v347 = vsel %vm345, %v315, 0
        %v350 = vsel %vm345, %v316, 0
        %v353 = vsel %vm345, %v317, 0
        %v356 = vsel %vm345, %v318, 0
        %v359 = vsel %vm345, %v319, 0
        %v362 = vsel %vm345, %v320, 0
        %v365 = vsel %vm345, %v321, 0
        %367 = vmatprep.subr.bf16.mxu0 0
        %368 = vmatpush1.bf16.msra.mxu0 0
        %369 = vmatprep.subr.bf16.mxu0 0
        %370 = vmatpush1.bf16.msra.mxu0 0
        %371 = vmatprep.subr.bf16.mxu0 0
        %372 = vmatpush1.bf16.msra.mxu0 0
        %373 = vmatprep.subr.bf16.mxu0 0
        %374 = vmatpush1.bf16.msra.mxu0 0
        %375 = vmatprep.subr.bf16.mxu0 0
        %376 = vmatpush1.bf16.msra.mxu0 0
        %377 = vmatprep.subr.bf16.mxu0 0
        %378 = vmatpush1.bf16.msra.mxu0 0
        %379 = vmatprep.subr.bf16.mxu0 0
        %380 = vmatpush1.bf16.msra.mxu0 %v342
        %381 = vmatprep.subr.bf16.mxu0 0
        %382 = vmatpush1.bf16.msra.mxu0 %v341
        %383 = vmatprep.subr.bf16.mxu0 0
        %384 = vmatpush2.bf16.msra.mxu0 0
        %385 = vmatprep.subr.bf16.mxu0 0
        %386 = vmatpush2.bf16.msra.mxu0 0
        %387 = vmatprep.subr.bf16.mxu0 0
        %388 = vmatpush2.bf16.msra.mxu0 0
        %389 = vmatprep.subr.bf16.mxu0 0
        %390 = vmatpush2.bf16.msra.mxu0 0
        %391 = vmatprep.subr.bf16.mxu0 0
        %392 = vmatpush2.bf16.msra.mxu0 0
        %393 = vmatprep.subr.bf16.mxu0 0
        %394 = vmatpush2.bf16.msra.mxu0 0
        %395 = vmatprep.subr.bf16.mxu0 0
        %396 = vmatpush2.bf16.msra.mxu0 0
        %397 = vmatprep.subr.bf16.mxu0 0
        %398 = vmatpush2.bf16.msra.mxu0 0
        %399 = vmatprep.mubr.bf16.mxu0 0
        %400 = vmatmul.mubr.bf16.gmra.mxu0 %v347
        %v401 = vpop.f32.mrf.mxu0
        %v402 = vadd.f32 %v331, %v401
        %v403 = vpop.f32.mrf.mxu0
        %v404 = vpop.f32.mrf.mxu0
        %v405 = vadd.f32 %v331, %v404
        %v406 = vpop.f32.mrf.mxu0
        %407 = vmatprep.mubr.bf16.mxu0 0
        %408 = vmatmul.mubr.bf16.gmra.mxu0 %v350
        %v409 = vpop.f32.mrf.mxu0
        %v410 = vadd.f32 %v331, %v409
        %v411 = vpop.f32.mrf.mxu0
        %v412 = vpop.f32.mrf.mxu0
        %v413 = vadd.f32 %v331, %v412
        %v414 = vpop.f32.mrf.mxu0
        %415 = vmatprep.mubr.bf16.mxu0 0
        %416 = vmatmul.mubr.bf16.gmra.mxu0 %v353
        %v417 = vpop.f32.mrf.mxu0
        %v418 = vadd.f32 %v331, %v417
        %v419 = vpop.f32.mrf.mxu0
        %v420 = vpop.f32.mrf.mxu0
        %v421 = vadd.f32 %v331, %v420
        %v422 = vpop.f32.mrf.mxu0
        %423 = vmatprep.mubr.bf16.mxu0 0
        %424 = vmatmul.mubr.bf16.gmra.mxu0 %v356
        %v425 = vpop.f32.mrf.mxu0
        %v426 = vadd.f32 %v331, %v425
        %v427 = vpop.f32.mrf.mxu0
        %v428 = vpop.f32.mrf.mxu0
        %v429 = vadd.f32 %v331, %v428
        %v430 = vpop.f32.mrf.mxu0
        %431 = vmatprep.mubr.bf16.mxu0 0
        %432 = vmatmul.mubr.bf16.gmra.mxu0 %v359
        %v433 = vpop.f32.mrf.mxu0
        %v434 = vadd.f32 %v331, %v433
        %v435 = vpop.f32.mrf.mxu0
        %v436 = vpop.f32.mrf.mxu0
        %v437 = vadd.f32 %v331, %v436
        %v438 = vpop.f32.mrf.mxu0
        %439 = vmatprep.mubr.bf16.mxu0 0
        %440 = vmatmul.mubr.bf16.gmra.mxu0 %v362
        %v441 = vpop.f32.mrf.mxu0
        %v442 = vadd.f32 %v331, %v441
        %v443 = vpop.f32.mrf.mxu0
        %v444 = vpop.f32.mrf.mxu0
        %v445 = vadd.f32 %v331, %v444
        %v446 = vpop.f32.mrf.mxu0
        %447 = vmatprep.mubr.bf16.mxu0 0
        %448 = vmatmul.mubr.bf16.gmra.mxu0 %v365
        %v449 = vpop.f32.mrf.mxu0
        %v450 = vadd.f32 %v331, %v449
        %v451 = vpop.f32.mrf.mxu0
        %v452 = vpop.f32.mrf.mxu0
        %v453 = vadd.f32 %v331, %v452
        %v454 = vpop.f32.mrf.mxu0
        %455 = vdwg.mxu0
        %v456 = vmax.f32 %v402, 0.0
        %v457 = vmax.f32 %v405, 0.0
        %v458 = vmax.f32 %v410, 0.0
        %v459 = vmax.f32 %v413, 0.0
        %v460 = vmax.f32 %v418, 0.0
        %v461 = vmax.f32 %v421, 0.0
        %v462 = vmax.f32 %v426, 0.0
        %v463 = vmax.f32 %v429, 0.0
        %v464 = vmax.f32 %v434, 0.0
        %v465 = vmax.f32 %v437, 0.0
        %v466 = vmax.f32 %v442, 0.0
        %v467 = vmax.f32 %v445, 0.0
        %v468 = vmax.f32 %v450, 0.0
        %v469 = vmax.f32 %v453, 0.0
        %v470 = vpack.c.bf16 %v457, %v456
        %v471 = vpack.c.bf16 %v459, %v458
        %v472 = vpack.c.bf16 %v461, %v460
        %v473 = vpack.c.bf16 %v463, %v462
        %v474 = vpack.c.bf16 %v465, %v464
        %v475 = vpack.c.bf16 %v467, %v466
        %v476 = vpack.c.bf16 %v469, %v468
        %v477 = vld [vmem:[%s3] sm:$0xf]
        %v478 = vld [vmem:[%s3 + $0x4] sm:$0xf]
        %v479 = vld [vmem:[%s3 + $0x8] sm:$0xf]
        %v480 = vld [vmem:[%s3 + $0xc] sm:$0xf]
        %v481 = vld [vmem:[%s3 + $0x10] sm:$0xf]
        %v482 = vld [vmem:[%s3 + $0x14] sm:$0xf]
        %v483 = vld [vmem:[%s3 + $0x18] sm:$0xf]
        %v484 = vld [vmem:[%s3 + $0x1c] sm:$0xf]
        %v485 = vld [vmem:[%s4] sm:$0x1]
        %v487 = vlaneseq
        %v488 = vshrl.u32 %v487, 7
        %v489 = vsub.s32 0, %v488
        %v490 = vrot.slane %v485, %v489
        %v500 = vunpack.c.l.b16 %v477
        %v501 = vunpack.c.l.b16 %v478
        %v502 = vunpack.c.l.b16 %v479
        %v503 = vunpack.c.l.b16 %v480
        %v504 = vunpack.c.l.b16 %v481
        %v505 = vunpack.c.l.b16 %v482
        %v506 = vunpack.c.l.b16 %v483
        %v507 = vunpack.c.l.b16 %v484
        %v508 = vpack.c.b16 %v501, %v500
        %v509 = vpack.c.b16 %v503, %v502
        %v510 = vpack.c.b16 %v505, %v504
        %v511 = vpack.c.b16 %v507, %v506
        %vm516 = vcmask 523264
        %v518 = vsel %vm516, %v470, 0
        %v521 = vsel %vm516, %v471, 0
        %v524 = vsel %vm516, %v472, 0
        %v527 = vsel %vm516, %v473, 0
        %v530 = vsel %vm516, %v474, 0
        %v533 = vsel %vm516, %v475, 0
        %v536 = vsel %vm516, %v476, 0
        %538 = vmatprep.subr.bf16.mxu0 0
        %539 = vmatpush1.bf16.msra.mxu0 0
        %540 = vmatprep.subr.bf16.mxu0 0
        %541 = vmatpush1.bf16.msra.mxu0 0
        %542 = vmatprep.subr.bf16.mxu0 0
        %543 = vmatpush1.bf16.msra.mxu0 0
        %544 = vmatprep.subr.bf16.mxu0 0
        %545 = vmatpush1.bf16.msra.mxu0 0
        %546 = vmatprep.subr.bf16.mxu0 0
        %547 = vmatpush1.bf16.msra.mxu0 %v511
        %548 = vmatprep.subr.bf16.mxu0 0
        %549 = vmatpush1.bf16.msra.mxu0 %v510
        %550 = vmatprep.subr.bf16.mxu0 0
        %551 = vmatpush1.bf16.msra.mxu0 %v509
        %552 = vmatprep.subr.bf16.mxu0 0
        %553 = vmatpush1.bf16.msra.mxu0 %v508
        %554 = vmatprep.subr.bf16.mxu0 0
        %555 = vmatpush2.bf16.msra.mxu0 0
        %556 = vmatprep.subr.bf16.mxu0 0
        %557 = vmatpush2.bf16.msra.mxu0 0
        %558 = vmatprep.subr.bf16.mxu0 0
        %559 = vmatpush2.bf16.msra.mxu0 0
        %560 = vmatprep.subr.bf16.mxu0 0
        %561 = vmatpush2.bf16.msra.mxu0 0
        %562 = vmatprep.subr.bf16.mxu0 0
        %563 = vmatpush2.bf16.msra.mxu0 0
        %564 = vmatprep.subr.bf16.mxu0 0
        %565 = vmatpush2.bf16.msra.mxu0 0
        %566 = vmatprep.subr.bf16.mxu0 0
        %567 = vmatpush2.bf16.msra.mxu0 0
        %568 = vmatprep.subr.bf16.mxu0 0
        %569 = vmatpush2.bf16.msra.mxu0 0
        %570 = vmatprep.mubr.bf16.mxu0 0
        %571 = vmatmul.mubr.bf16.gmra.mxu0 %v518
        %v572 = vpop.f32.mrf.mxu0
        %v573 = vadd.f32 %v490, %v572
        %v574 = vpop.f32.mrf.mxu0
        %v575 = vpop.f32.mrf.mxu0
        %v576 = vadd.f32 %v490, %v575
        %v577 = vpop.f32.mrf.mxu0
        %578 = vmatprep.mubr.bf16.mxu0 0
        %579 = vmatmul.mubr.bf16.gmra.mxu0 %v521
        %v580 = vpop.f32.mrf.mxu0
        %v581 = vadd.f32 %v490, %v580
        %v582 = vpop.f32.mrf.mxu0
        %v583 = vpop.f32.mrf.mxu0
        %v584 = vadd.f32 %v490, %v583
        %v585 = vpop.f32.mrf.mxu0
        %586 = vmatprep.mubr.bf16.mxu0 0
        %587 = vmatmul.mubr.bf16.gmra.mxu0 %v524
        %v588 = vpop.f32.mrf.mxu0
        %v589 = vadd.f32 %v490, %v588
        %v590 = vpop.f32.mrf.mxu0
        %v591 = vpop.f32.mrf.mxu0
        %v592 = vadd.f32 %v490, %v591
        %v593 = vpop.f32.mrf.mxu0
        %594 = vmatprep.mubr.bf16.mxu0 0
        %595 = vmatmul.mubr.bf16.gmra.mxu0 %v527
        %v596 = vpop.f32.mrf.mxu0
        %v597 = vadd.f32 %v490, %v596
        %v598 = vpop.f32.mrf.mxu0
        %v599 = vpop.f32.mrf.mxu0
        %v600 = vadd.f32 %v490, %v599
        %v601 = vpop.f32.mrf.mxu0
        %602 = vmatprep.mubr.bf16.mxu0 0
        %603 = vmatmul.mubr.bf16.gmra.mxu0 %v530
        %v604 = vpop.f32.mrf.mxu0
        %v605 = vadd.f32 %v490, %v604
        %v606 = vpop.f32.mrf.mxu0
        %v607 = vpop.f32.mrf.mxu0
        %v608 = vadd.f32 %v490, %v607
        %v609 = vpop.f32.mrf.mxu0
        %610 = vmatprep.mubr.bf16.mxu0 0
        %611 = vmatmul.mubr.bf16.gmra.mxu0 %v533
        %v612 = vpop.f32.mrf.mxu0
        %v613 = vadd.f32 %v490, %v612
        %v614 = vpop.f32.mrf.mxu0
        %v615 = vpop.f32.mrf.mxu0
        %v616 = vadd.f32 %v490, %v615
        %v617 = vpop.f32.mrf.mxu0
        %618 = vmatprep.mubr.bf16.mxu0 0
        %619 = vmatmul.mubr.bf16.gmra.mxu0 %v536
        %v620 = vpop.f32.mrf.mxu0
        %v621 = vadd.f32 %v490, %v620
        %v622 = vpop.f32.mrf.mxu0
        %v623 = vpop.f32.mrf.mxu0
        %v624 = vadd.f32 %v490, %v623
        %v625 = vpop.f32.mrf.mxu0
        %626 = vdwg.mxu0
        %v627 = vmax.f32 %v573, 0.0
        %v628 = vmax.f32 %v576, 0.0
        %v629 = vmax.f32 %v581, 0.0
        %v630 = vmax.f32 %v584, 0.0
        %v631 = vmax.f32 %v589, 0.0
        %v632 = vmax.f32 %v592, 0.0
        %v633 = vmax.f32 %v597, 0.0
        %v634 = vmax.f32 %v600, 0.0
        %v635 = vmax.f32 %v605, 0.0
        %v636 = vmax.f32 %v608, 0.0
        %v637 = vmax.f32 %v613, 0.0
        %v638 = vmax.f32 %v616, 0.0
        %v639 = vmax.f32 %v621, 0.0
        %v640 = vmax.f32 %v624, 0.0
        %v641 = vpack.c.bf16 %v628, %v627
        %v642 = vpack.c.bf16 %v630, %v629
        %v643 = vpack.c.bf16 %v632, %v631
        %v644 = vpack.c.bf16 %v634, %v633
        %v645 = vpack.c.bf16 %v636, %v635
        %v646 = vpack.c.bf16 %v638, %v637
        %v647 = vpack.c.bf16 %v640, %v639
        %v648 = vld [vmem:[%s5] sm:$0xf]
        %v649 = vld [vmem:[%s5 + $0x4] sm:$0xf]
        %v650 = vld [vmem:[%s5 + $0x8] sm:$0xf]
        %v651 = vld [vmem:[%s5 + $0xc] sm:$0xf]
        %v652 = vld [vmem:[%s6] sm:$0x1]
        %v654 = vlaneseq
        %v655 = vshrl.u32 %v654, 7
        %v656 = vsub.s32 0, %v655
        %v657 = vrot.slane %v652, %v656
        %v663 = vunpack.c.l.b16 %v648
        %v664 = vunpack.c.l.b16 %v649
        %v665 = vunpack.c.l.b16 %v650
        %v666 = vunpack.c.l.b16 %v651
        %v667 = vpack.c.b16 %v664, %v663
        %v668 = vpack.c.b16 %v666, %v665
        %v672 = vsel %vm345, %v641, 0
        %v675 = vsel %vm345, %v642, 0
        %v678 = vsel %vm345, %v643, 0
        %v681 = vsel %vm345, %v644, 0
        %v684 = vsel %vm345, %v645, 0
        %v687 = vsel %vm345, %v646, 0
        %v690 = vsel %vm345, %v647, 0
        %692 = vmatprep.subr.bf16.mxu0 0
        %693 = vmatpush1.bf16.msra.mxu0 0
        %694 = vmatprep.subr.bf16.mxu0 0
        %695 = vmatpush1.bf16.msra.mxu0 0
        %696 = vmatprep.subr.bf16.mxu0 0
        %697 = vmatpush1.bf16.msra.mxu0 0
        %698 = vmatprep.subr.bf16.mxu0 0
        %699 = vmatpush1.bf16.msra.mxu0 0
        %700 = vmatprep.subr.bf16.mxu0 0
        %701 = vmatpush1.bf16.msra.mxu0 0
        %702 = vmatprep.subr.bf16.mxu0 0
        %703 = vmatpush1.bf16.msra.mxu0 0
        %704 = vmatprep.subr.bf16.mxu0 0
        %705 = vmatpush1.bf16.msra.mxu0 %v668
        %706 = vmatprep.subr.bf16.mxu0 0
        %707 = vmatpush1.bf16.msra.mxu0 %v667
        %708 = vmatprep.subr.bf16.mxu0 0
        %709 = vmatpush2.bf16.msra.mxu0 0
        %710 = vmatprep.subr.bf16.mxu0 0
        %711 = vmatpush2.bf16.msra.mxu0 0
        %712 = vmatprep.subr.bf16.mxu0 0
        %713 = vmatpush2.bf16.msra.mxu0 0
        %714 = vmatprep.subr.bf16.mxu0 0
        %715 = vmatpush2.bf16.msra.mxu0 0
        %716 = vmatprep.subr.bf16.mxu0 0
        %717 = vmatpush2.bf16.msra.mxu0 0
        %718 = vmatprep.subr.bf16.mxu0 0
        %719 = vmatpush2.bf16.msra.mxu0 0
        %720 = vmatprep.subr.bf16.mxu0 0
        %721 = vmatpush2.bf16.msra.mxu0 0
        %722 = vmatprep.subr.bf16.mxu0 0
        %723 = vmatpush2.bf16.msra.mxu0 0
        %724 = vmatprep.mubr.bf16.mxu0 0
        %725 = vmatmul.mubr.bf16.gmra.mxu0 %v672
        %v726 = vpop.f32.mrf.mxu0
        %v727 = vadd.f32 %v657, %v726
        %v728 = vpop.f32.mrf.mxu0
        %v729 = vpop.f32.mrf.mxu0
        %v730 = vadd.f32 %v657, %v729
        %v731 = vpop.f32.mrf.mxu0
        %732 = vmatprep.mubr.bf16.mxu0 0
        %733 = vmatmul.mubr.bf16.gmra.mxu0 %v675
        %v734 = vpop.f32.mrf.mxu0
        %v735 = vadd.f32 %v657, %v734
        %v736 = vpop.f32.mrf.mxu0
        %v737 = vpop.f32.mrf.mxu0
        %v738 = vadd.f32 %v657, %v737
        %v739 = vpop.f32.mrf.mxu0
        %740 = vmatprep.mubr.bf16.mxu0 0
        %741 = vmatmul.mubr.bf16.gmra.mxu0 %v678
        %v742 = vpop.f32.mrf.mxu0
        %v743 = vadd.f32 %v657, %v742
        %v744 = vpop.f32.mrf.mxu0
        %v745 = vpop.f32.mrf.mxu0
        %v746 = vadd.f32 %v657, %v745
        %v747 = vpop.f32.mrf.mxu0
        %748 = vmatprep.mubr.bf16.mxu0 0
        %749 = vmatmul.mubr.bf16.gmra.mxu0 %v681
        %v750 = vpop.f32.mrf.mxu0
        %v751 = vadd.f32 %v657, %v750
        %v752 = vpop.f32.mrf.mxu0
        %v753 = vpop.f32.mrf.mxu0
        %v754 = vadd.f32 %v657, %v753
        %v755 = vpop.f32.mrf.mxu0
        %756 = vmatprep.mubr.bf16.mxu0 0
        %757 = vmatmul.mubr.bf16.gmra.mxu0 %v684
        %v758 = vpop.f32.mrf.mxu0
        %v759 = vadd.f32 %v657, %v758
        %v760 = vpop.f32.mrf.mxu0
        %v761 = vpop.f32.mrf.mxu0
        %v762 = vadd.f32 %v657, %v761
        %v763 = vpop.f32.mrf.mxu0
        %764 = vmatprep.mubr.bf16.mxu0 0
        %765 = vmatmul.mubr.bf16.gmra.mxu0 %v687
        %v766 = vpop.f32.mrf.mxu0
        %v767 = vadd.f32 %v657, %v766
        %v768 = vpop.f32.mrf.mxu0
        %v769 = vpop.f32.mrf.mxu0
        %v770 = vadd.f32 %v657, %v769
        %v771 = vpop.f32.mrf.mxu0
        %772 = vmatprep.mubr.bf16.mxu0 0
        %773 = vmatmul.mubr.bf16.gmra.mxu0 %v690
        %v774 = vpop.f32.mrf.mxu0
        %v775 = vadd.f32 %v657, %v774
        %v776 = vpop.f32.mrf.mxu0
        %v777 = vpop.f32.mrf.mxu0
        %v778 = vadd.f32 %v657, %v777
        %v779 = vpop.f32.mrf.mxu0
        %780 = vdwg.mxu0
        %vm781 = vcmask 130048
        %v782 = vsel %vm781, %v727, -inf
        %783 = vmax.xlane.f32.xlu0 %v782
        %v784 = vpop.xlane.xlu0 %783
        %v785 = vsel %vm781, %v730, -inf
        %786 = vmax.xlane.f32.xlu0 %v785
        %v787 = vpop.xlane.xlu0 %786
        %v788 = vsel %vm781, %v735, -inf
        %789 = vmax.xlane.f32.xlu0 %v788
        %v790 = vpop.xlane.xlu0 %789
        %v791 = vsel %vm781, %v738, -inf
        %792 = vmax.xlane.f32.xlu0 %v791
        %v793 = vpop.xlane.xlu0 %792
        %v794 = vsel %vm781, %v743, -inf
        %795 = vmax.xlane.f32.xlu0 %v794
        %v796 = vpop.xlane.xlu0 %795
        %v797 = vsel %vm781, %v746, -inf
        %798 = vmax.xlane.f32.xlu0 %v797
        %v799 = vpop.xlane.xlu0 %798
        %v800 = vsel %vm781, %v751, -inf
        %801 = vmax.xlane.f32.xlu0 %v800
        %v802 = vpop.xlane.xlu0 %801
        %v803 = vsel %vm781, %v754, -inf
        %804 = vmax.xlane.f32.xlu0 %v803
        %v805 = vpop.xlane.xlu0 %804
        %v806 = vsel %vm781, %v759, -inf
        %807 = vmax.xlane.f32.xlu0 %v806
        %v808 = vpop.xlane.xlu0 %807
        %v809 = vsel %vm781, %v762, -inf
        %810 = vmax.xlane.f32.xlu0 %v809
        %v811 = vpop.xlane.xlu0 %810
        %v812 = vsel %vm781, %v767, -inf
        %813 = vmax.xlane.f32.xlu0 %v812
        %v814 = vpop.xlane.xlu0 %813
        %v815 = vsel %vm781, %v770, -inf
        %816 = vmax.xlane.f32.xlu0 %v815
        %v817 = vpop.xlane.xlu0 %816
        %v818 = vsel %vm781, %v775, -inf
        %819 = vmax.xlane.f32.xlu0 %v818
        %v820 = vpop.xlane.xlu0 %819
        %v821 = vsel %vm781, %v778, -inf
        %822 = vmax.xlane.f32.xlu0 %v821
        %v823 = vpop.xlane.xlu0 %822
        %v824 = vsub.f32 %v727, %v784
        %v825 = vsub.f32 %v730, %v787
        %v826 = vsub.f32 %v735, %v790
        %v827 = vsub.f32 %v738, %v793
        %v828 = vsub.f32 %v743, %v796
        %v829 = vsub.f32 %v746, %v799
        %v830 = vsub.f32 %v751, %v802
        %v831 = vsub.f32 %v754, %v805
        %v832 = vsub.f32 %v759, %v808
        %v833 = vsub.f32 %v762, %v811
        %v834 = vsub.f32 %v767, %v814
        %v835 = vsub.f32 %v770, %v817
        %v836 = vsub.f32 %v775, %v820
        %v837 = vsub.f32 %v778, %v823
        %v838 = vmul.f32 %v824, 1.442695
        %v839 = vpow.pop %v838
        %v840 = vmul.f32 %v825, 1.442695
        %v841 = vpow.pop %v840
        %v842 = vmul.f32 %v826, 1.442695
        %v843 = vpow.pop %v842
        %v844 = vmul.f32 %v827, 1.442695
        %v845 = vpow.pop %v844
        %v846 = vmul.f32 %v828, 1.442695
        %v847 = vpow.pop %v846
        %v848 = vmul.f32 %v829, 1.442695
        %v849 = vpow.pop %v848
        %v850 = vmul.f32 %v830, 1.442695
        %v851 = vpow.pop %v850
        %v852 = vmul.f32 %v831, 1.442695
        %v853 = vpow.pop %v852
        %v854 = vmul.f32 %v832, 1.442695
        %v855 = vpow.pop %v854
        %v856 = vmul.f32 %v833, 1.442695
        %v857 = vpow.pop %v856
        %v858 = vmul.f32 %v834, 1.442695
        %v859 = vpow.pop %v858
        %v860 = vmul.f32 %v835, 1.442695
        %v861 = vpow.pop %v860
        %v862 = vmul.f32 %v836, 1.442695
        %v863 = vpow.pop %v862
        %v864 = vmul.f32 %v837, 1.442695
        %v865 = vpow.pop %v864
        %v866 = vsel %vm781, %v839, 0.0
        %867 = vadd.xlane.f32.xlu0 %v866
        %v868 = vpop.xlane.xlu0 %867
        %v869 = vsel %vm781, %v841, 0.0
        %870 = vadd.xlane.f32.xlu0 %v869
        %v871 = vpop.xlane.xlu0 %870
        %v872 = vsel %vm781, %v843, 0.0
        %873 = vadd.xlane.f32.xlu0 %v872
        %v874 = vpop.xlane.xlu0 %873
        %v875 = vsel %vm781, %v845, 0.0
        %876 = vadd.xlane.f32.xlu0 %v875
        %v877 = vpop.xlane.xlu0 %876
        %v878 = vsel %vm781, %v847, 0.0
        %879 = vadd.xlane.f32.xlu0 %v878
        %v880 = vpop.xlane.xlu0 %879
        %v881 = vsel %vm781, %v849, 0.0
        %882 = vadd.xlane.f32.xlu0 %v881
        %v883 = vpop.xlane.xlu0 %882
        %v884 = vsel %vm781, %v851, 0.0
        %885 = vadd.xlane.f32.xlu0 %v884
        %v886 = vpop.xlane.xlu0 %885
        %v887 = vsel %vm781, %v853, 0.0
        %888 = vadd.xlane.f32.xlu0 %v887
        %v889 = vpop.xlane.xlu0 %888
        %v890 = vsel %vm781, %v855, 0.0
        %891 = vadd.xlane.f32.xlu0 %v890
        %v892 = vpop.xlane.xlu0 %891
        %v893 = vsel %vm781, %v857, 0.0
        %894 = vadd.xlane.f32.xlu0 %v893
        %v895 = vpop.xlane.xlu0 %894
        %v896 = vsel %vm781, %v859, 0.0
        %897 = vadd.xlane.f32.xlu0 %v896
        %v898 = vpop.xlane.xlu0 %897
        %v899 = vsel %vm781, %v861, 0.0
        %900 = vadd.xlane.f32.xlu0 %v899
        %v901 = vpop.xlane.xlu0 %900
        %v902 = vsel %vm781, %v863, 0.0
        %903 = vadd.xlane.f32.xlu0 %v902
        %v904 = vpop.xlane.xlu0 %903
        %v905 = vsel %vm781, %v865, 0.0
        %906 = vadd.xlane.f32.xlu0 %v905
        %v907 = vpop.xlane.xlu0 %906
        %v908 = vrcp.pop %v868
        %v909 = vrcp.pop %v871
        %v910 = vrcp.pop %v874
        %v911 = vrcp.pop %v877
        %v912 = vrcp.pop %v880
        %v913 = vrcp.pop %v883
        %v914 = vrcp.pop %v886
        %v915 = vrcp.pop %v889
        %v916 = vrcp.pop %v892
        %v917 = vrcp.pop %v895
        %v918 = vrcp.pop %v898
        %v919 = vrcp.pop %v901
        %v920 = vrcp.pop %v904
        %v921 = vrcp.pop %v907
        %v922 = vmul.f32 %v839, %v908
        %v923 = vmul.f32 %v841, %v909
        %v924 = vmul.f32 %v843, %v910
        %v925 = vmul.f32 %v845, %v911
        %v926 = vmul.f32 %v847, %v912
        %v927 = vmul.f32 %v849, %v913
        %v928 = vmul.f32 %v851, %v914
        %v929 = vmul.f32 %v853, %v915
        %v930 = vmul.f32 %v855, %v916
        %v931 = vmul.f32 %v857, %v917
        %v932 = vmul.f32 %v859, %v918
        %v933 = vmul.f32 %v861, %v919
        %v934 = vmul.f32 %v863, %v920
        %v935 = vmul.f32 %v865, %v921
        %936 = vst.msk [vmem:[%s280] sm:$0xff] %vm781, %v922
        %937 = vst.msk [vmem:[%s280 + $0x8] sm:$0xff] %vm781, %v923
        %938 = vst.msk [vmem:[%s280 + $0x10] sm:$0xff] %vm781, %v924
        %939 = vst.msk [vmem:[%s280 + $0x18] sm:$0xff] %vm781, %v925
        %940 = vst.msk [vmem:[%s280 + $0x20] sm:$0xff] %vm781, %v926
        %941 = vst.msk [vmem:[%s280 + $0x28] sm:$0xff] %vm781, %v927
        %942 = vst.msk [vmem:[%s280 + $0x30] sm:$0xff] %vm781, %v928
        %943 = vst.msk [vmem:[%s280 + $0x38] sm:$0xff] %vm781, %v929
        %944 = vst.msk [vmem:[%s280 + $0x40] sm:$0xff] %vm781, %v930
        %945 = vst.msk [vmem:[%s280 + $0x48] sm:$0xff] %vm781, %v931
        %946 = vst.msk [vmem:[%s280 + $0x50] sm:$0xff] %vm781, %v932
        %947 = vst.msk [vmem:[%s280 + $0x58] sm:$0xff] %vm781, %v933
        %948 = vst.msk [vmem:[%s280 + $0x60] sm:$0xff] %vm781, %v934
        %949 = vst.msk [vmem:[%s280 + $0x68] sm:$0xff] %vm781, %v935
        %s950 = sand.u32 %s178, 1
        %s951 = sand.u32 %s178, 1
        %s952 = smul.addr %s951, 112
        %s953 = scalar_lea.vmem [#allocation2], %s952
        // Predicated region
        $region49: #{_run.1} parent=47 // pred_check
          %p954 = pneg %p188
        $region50: #{_run.1} parent=47 // pred_check_branch
          %956 = sbr.rel (%p954) target = $region52
        $region51: #{_run.1} parent=47 // pred_region
          %s957 = smul.u32 14, %s18
          %s958 = ssub.s32 25, %s957
          %p959 = scmp.lt.s32.totalorder %s958, 14
          %s960 = scalar_select %p959, %s958, 14
          %s961 = smul.u32 128, %s960
          %p962 = scmp.ne.s32.totalorder 0, %s961
          %s963 = smul.addr %s957, 8
          %s964 = scalar_lea.vmem %s7, %s963
          // Predicated region
          $region53: #{_run.1} parent=51 // pred_check
            %p965 = pneg %p962
          $region54: #{_run.1} parent=51 // pred_check_branch
            %967 = sbr.rel (%p965) target = $region56
          $region55: #{_run.1} parent=51 // pred_region
            // Predicated region
            $region57: #{_run.1} parent=55 // pred_check
              _
            $region58: #{_run.1} parent=55 // pred_check_branch
              %969 = sbr.rel (0) target = $region60
            $region59: #{_run.1} parent=55 // pred_region
              // Predicated region
              $region79: #{_run.1} parent=59 // pred_check
                _
              $region80: #{_run.1} parent=59 // pred_check_branch
                %1046 = sbr.rel (0) target = $region82
              $region81: #{_run.1} parent=59 // pred_region
                %s1047 = sdiv.u32.pop %s960, 14
                %s1048 = srem.u32.pop %s960, 14
                // While loop
                $region83: #{_run.1} parent=81 // loop_pre_header
                  _
                $region84: #{_run.1} parent=81 // loop_header
                  %s1050 = sphi 0, %s1052
                  %p1051 = scmp.ge.s32.totalorder %s1050, %s1047
                  %s1055 = sphi 0, %s1088
                  %s1056 = sphi %s953, %s1091
                  %s1057 = sphi %s964, %s1092
                $region85: #{_run.1} parent=81 // loop_header_branch
                  %1054 = sbr.rel (%p1051) target = $region89
                $region86: #{_run.1} parent=81 // loop_body
                  %v1058 = vld [vmem:[%s1056] sm:$0xff]
                  %1059 = vst [vmem:[%s1057] sm:$0xff] %v1058
                  %v1060 = vld [vmem:[%s1056 + $0x8] sm:$0xff]
                  %1061 = vst [vmem:[%s1057 + $0x8] sm:$0xff] %v1060
                  %v1062 = vld [vmem:[%s1056 + $0x10] sm:$0xff]
                  %1063 = vst [vmem:[%s1057 + $0x10] sm:$0xff] %v1062
                  %v1064 = vld [vmem:[%s1056 + $0x18] sm:$0xff]
                  %1065 = vst [vmem:[%s1057 + $0x18] sm:$0xff] %v1064
                  %v1066 = vld [vmem:[%s1056 + $0x20] sm:$0xff]
                  %1067 = vst [vmem:[%s1057 + $0x20] sm:$0xff] %v1066
                  %v1068 = vld [vmem:[%s1056 + $0x28] sm:$0xff]
                  %1069 = vst [vmem:[%s1057 + $0x28] sm:$0xff] %v1068
                  %v1070 = vld [vmem:[%s1056 + $0x30] sm:$0xff]
                  %1071 = vst [vmem:[%s1057 + $0x30] sm:$0xff] %v1070
                  %v1072 = vld [vmem:[%s1056 + $0x38] sm:$0xff]
                  %1073 = vst [vmem:[%s1057 + $0x38] sm:$0xff] %v1072
                  %v1074 = vld [vmem:[%s1056 + $0x40] sm:$0xff]
                  %1075 = vst [vmem:[%s1057 + $0x40] sm:$0xff] %v1074
                  %v1076 = vld [vmem:[%s1056 + $0x48] sm:$0xff]
                  %1077 = vst [vmem:[%s1057 + $0x48] sm:$0xff] %v1076
                  %v1078 = vld [vmem:[%s1056 + $0x50] sm:$0xff]
                  %1079 = vst [vmem:[%s1057 + $0x50] sm:$0xff] %v1078
                  %v1080 = vld [vmem:[%s1056 + $0x58] sm:$0xff]
                  %1081 = vst [vmem:[%s1057 + $0x58] sm:$0xff] %v1080
                  %v1082 = vld [vmem:[%s1056 + $0x60] sm:$0xff]
                  %1083 = vst [vmem:[%s1057 + $0x60] sm:$0xff] %v1082
                  %v1084 = vld [vmem:[%s1056 + $0x68] sm:$0xff]
                  %1085 = vst [vmem:[%s1057 + $0x68] sm:$0xff] %v1084
                  %s1086 = sadd.s32 1, %s1055
                  %p1087 = scmp.ge.s32.totalorder %s1086, %s1047
                  %s1088 = scalar_select %p1087, 0, %s1086
                  %s1089 = smul.u32 %s1088, 112
                  %s1090 = smul.u32 %s1088, 112
                  %s1091 = scalar_lea.vmem %s953, %s1089 [#allocation2]
                  %s1092 = scalar_lea.vmem %s964, %s1090
                $region87: #{_run.1} parent=81 // loop_footer
                  %s1052 = sadd.s32 %s1050, 1
                $region88: #{_run.1} parent=81 // loop_footer_branch
                  %1049 = sbr.rel target = $region84
                $region89: #{_run.1} parent=81 // loop_exit
                  _
                %s1093 = sdiv.u32.pop %s960, 14
                %s1094 = srem.u32.pop %s960, 14
                %s1095 = smul.u32 %s1093, 14
                %s1096 = smul.u32 8, %s1095
                %s1097 = scalar_lea.vmem %s953, %s1096 [#allocation2]
                %s1098 = smul.u32 8, %s1095
                %s1099 = scalar_lea.vmem %s964, %s1098
                // While loop
                $region90: #{_run.1} parent=81 // loop_pre_header
                  _
                $region91: #{_run.1} parent=81 // loop_header
                  %s1101 = sphi 0, %s1103
                  %p1102 = scmp.ge.s32.totalorder %s1101, %s1094
                  %s1106 = sphi 0, %s1113
                  %s1107 = sphi %s1097, %s1116
                  %s1108 = sphi %s1099, %s1117
                $region92: #{_run.1} parent=81 // loop_header_branch
                  %1105 = sbr.rel (%p1102) target = $region96
                $region93: #{_run.1} parent=81 // loop_body
                  %v1109 = vld [vmem:[%s1107] sm:$0xff]
                  %1110 = vst [vmem:[%s1108] sm:$0xff] %v1109
                  %s1111 = sadd.s32 1, %s1106
                  %p1112 = scmp.ge.s32.totalorder %s1111, %s1094
                  %s1113 = scalar_select %p1112, 0, %s1111
                  %s1114 = smul.u32 %s1113, 8
                  %s1115 = smul.u32 %s1113, 8
                  %s1116 = scalar_lea.vmem %s1097, %s1114 [#allocation2]
                  %s1117 = scalar_lea.vmem %s1099, %s1115
                $region94: #{_run.1} parent=81 // loop_footer
                  %s1103 = sadd.s32 %s1101, 1
                $region95: #{_run.1} parent=81 // loop_footer_branch
                  %1100 = sbr.rel target = $region91
                $region96: #{_run.1} parent=81 // loop_exit
                  _
              $region82: #{_run.1} parent=59 // pred_fallthru
                _
              // Predicated region
              $region97: #{_run.1} parent=59 // pred_check
                _
              $region98: #{_run.1} parent=59 // pred_check_branch
                %1119 = sbr.rel target = $region100
              $region99: #{_run.1} parent=59 // pred_region
                _
              $region100: #{_run.1} parent=59 // pred_fallthru
                _
            $region60: #{_run.1} parent=55 // pred_fallthru
              _
            // Predicated region
            $region61: #{_run.1} parent=55 // pred_check
              _
            $region62: #{_run.1} parent=55 // pred_check_branch
              %971 = sbr.rel target = $region64
            $region63: #{_run.1} parent=55 // pred_region
              %s973 = ssub.s32 256, 1
              %s974 = sdiv.u32.pop %s960, 14
              %s975 = srem.u32.pop %s960, 14
              // While loop
              $region65: #{_run.1} parent=63 // loop_pre_header
                _
              $region66: #{_run.1} parent=63 // loop_header
                %s977 = sphi 0, %s979
                %p978 = scmp.ge.s32.totalorder %s977, %s974
                %s982 = sphi 0, %s1015
                %s983 = sphi %s953, %s1018
                %s984 = sphi %s964, %s1019
              $region67: #{_run.1} parent=63 // loop_header_branch
                %981 = sbr.rel (%p978) target = $region71
              $region68: #{_run.1} parent=63 // loop_body
                %v985 = vld [vmem:[%s983] sm:%s973]
                %986 = vst [vmem:[%s984] sm:%s973] %v985
                %v987 = vld [vmem:[%s983 + $0x8] sm:%s973]
                %988 = vst [vmem:[%s984 + $0x8] sm:%s973] %v987
                %v989 = vld [vmem:[%s983 + $0x10] sm:%s973]
                %990 = vst [vmem:[%s984 + $0x10] sm:%s973] %v989
                %v991 = vld [vmem:[%s983 + $0x18] sm:%s973]
                %992 = vst [vmem:[%s984 + $0x18] sm:%s973] %v991
                %v993 = vld [vmem:[%s983 + $0x20] sm:%s973]
                %994 = vst [vmem:[%s984 + $0x20] sm:%s973] %v993
                %v995 = vld [vmem:[%s983 + $0x28] sm:%s973]
                %996 = vst [vmem:[%s984 + $0x28] sm:%s973] %v995
                %v997 = vld [vmem:[%s983 + $0x30] sm:%s973]
                %998 = vst [vmem:[%s984 + $0x30] sm:%s973] %v997
                %v999 = vld [vmem:[%s983 + $0x38] sm:%s973]
                %1000 = vst [vmem:[%s984 + $0x38] sm:%s973] %v999
                %v1001 = vld [vmem:[%s983 + $0x40] sm:%s973]
                %1002 = vst [vmem:[%s984 + $0x40] sm:%s973] %v1001
                %v1003 = vld [vmem:[%s983 + $0x48] sm:%s973]
                %1004 = vst [vmem:[%s984 + $0x48] sm:%s973] %v1003
                %v1005 = vld [vmem:[%s983 + $0x50] sm:%s973]
                %1006 = vst [vmem:[%s984 + $0x50] sm:%s973] %v1005
                %v1007 = vld [vmem:[%s983 + $0x58] sm:%s973]
                %1008 = vst [vmem:[%s984 + $0x58] sm:%s973] %v1007
                %v1009 = vld [vmem:[%s983 + $0x60] sm:%s973]
                %1010 = vst [vmem:[%s984 + $0x60] sm:%s973] %v1009
                %v1011 = vld [vmem:[%s983 + $0x68] sm:%s973]
                %1012 = vst [vmem:[%s984 + $0x68] sm:%s973] %v1011
                %s1013 = sadd.s32 1, %s982
                %p1014 = scmp.ge.s32.totalorder %s1013, %s974
                %s1015 = scalar_select %p1014, 0, %s1013
                %s1016 = smul.u32 %s1015, 112
                %s1017 = smul.u32 %s1015, 112
                %s1018 = scalar_lea.vmem %s953, %s1016 [#allocation2]
                %s1019 = scalar_lea.vmem %s964, %s1017
              $region69: #{_run.1} parent=63 // loop_footer
                %s979 = sadd.s32 %s977, 1
              $region70: #{_run.1} parent=63 // loop_footer_branch
                %976 = sbr.rel target = $region66
              $region71: #{_run.1} parent=63 // loop_exit
                _
              %s1020 = sdiv.u32.pop %s960, 14
              %s1021 = srem.u32.pop %s960, 14
              %s1022 = smul.u32 %s1020, 14
              %s1023 = smul.u32 8, %s1022
              %s1024 = scalar_lea.vmem %s953, %s1023 [#allocation2]
              %s1025 = smul.u32 8, %s1022
              %s1026 = scalar_lea.vmem %s964, %s1025
              // While loop
              $region72: #{_run.1} parent=63 // loop_pre_header
                _
              $region73: #{_run.1} parent=63 // loop_header
                %s1028 = sphi 0, %s1030
                %p1029 = scmp.ge.s32.totalorder %s1028, %s1021
                %s1033 = sphi 0, %s1040
                %s1034 = sphi %s1024, %s1043
                %s1035 = sphi %s1026, %s1044
              $region74: #{_run.1} parent=63 // loop_header_branch
                %1032 = sbr.rel (%p1029) target = $region78
              $region75: #{_run.1} parent=63 // loop_body
                %v1036 = vld [vmem:[%s1034] sm:%s973]
                %1037 = vst [vmem:[%s1035] sm:%s973] %v1036
                %s1038 = sadd.s32 1, %s1033
                %p1039 = scmp.ge.s32.totalorder %s1038, %s1021
                %s1040 = scalar_select %p1039, 0, %s1038
                %s1041 = smul.u32 %s1040, 8
                %s1042 = smul.u32 %s1040, 8
                %s1043 = scalar_lea.vmem %s1024, %s1041 [#allocation2]
                %s1044 = scalar_lea.vmem %s1026, %s1042
              $region76: #{_run.1} parent=63 // loop_footer
                %s1030 = sadd.s32 %s1028, 1
              $region77: #{_run.1} parent=63 // loop_footer_branch
                %1027 = sbr.rel target = $region73
              $region78: #{_run.1} parent=63 // loop_exit
                _
            $region64: #{_run.1} parent=55 // pred_fallthru
              _
          $region56: #{_run.1} parent=51 // pred_fallthru
            _
          %1120 = vnop
        $region52: #{_run.1} parent=47 // pred_fallthru
          _
      $region48: #{_run.1} parent=5 // pred_fallthru
        _
      %p1121 = scmp.le.s32.totalorder 2, %s13
      // Predicated region
      $region101: #{_run.1} parent=5 // pred_check
        %p1122 = pneg %p1121
      $region102: #{_run.1} parent=5 // pred_check_branch
        %1124 = sbr.rel (%p1122) target = $region104
      $region103: #{_run.1} parent=5 // pred_region
        %s1125 = ssub.s32 %s13, 2
        // Predicated region
        $region105: #{_run.1} parent=103 // pred_check
          %p1126 = pneg %p194
        $region106: #{_run.1} parent=103 // pred_check_branch
          %1128 = sbr.rel (%p1126) target = $region108
        $region107: #{_run.1} parent=103 // pred_region
          %s1129 = sand.u32 %s179, 1
          %s1130 = sand.u32 %s179, 1
          %s1131 = smul.addr %s1130, 112
          %s1132 = scalar_lea.vmem [#allocation2], %s1131
        $region108: #{_run.1} parent=103 // pred_fallthru
          _
      $region104: #{_run.1} parent=5 // pred_fallthru
        _
    $region6: #{_run.1} parent=1 // loop_footer
      %s17 = sadd.s32 1, %s13
    $region7: #{_run.1} parent=1 // loop_footer_branch
      %12 = sbr.rel target = $region3
    $region8: #{_run.1} parent=1 // loop_exit
      _

</llo_original>
